<compile_context>
chip_gen: v7x
topology: tpu7x:2x2x1
jax: 0.10.0
libtpu: 0.0.40
codegen_flags: <defaults>
</compile_context>

<pallas_src>
import functools
import math

import jax
import jax.numpy as jnp
from jax.experimental import pallas as pl
from jax.experimental.pallas import tpu as pltpu


def _round_up(x, m):
    return ((x + m - 1) // m) * m


# --------------------------------------------------------------------------
# One SAGEConv layer (mean aggregation + fused [W_l; W_r] linear + bias).
# --------------------------------------------------------------------------
def _sage_layer_kernel(adj_ref, xk_ref, xi_ref, w_ref, b_ref, out_ref,
                       acc_ref, deg_ref, *, apply_relu):
    k = pl.program_id(1)

    @pl.when(k == 0)
    def _():
        acc_ref[...] = jnp.zeros_like(acc_ref)
        deg_ref[...] = jnp.zeros_like(deg_ref)

    adj = adj_ref[...]                                      # [tm, tk] bf16 (0/1)
    # Neighbor feature sum (MXU, f32 accumulation).
    acc_ref[...] += jnp.dot(adj, xk_ref[...],
                            preferred_element_type=jnp.float32)
    # Row-degree accumulation (XLU reduce, f32 — exact for 0/1 entries).
    deg_ref[...] += jnp.sum(adj.astype(jnp.float32), axis=-1, keepdims=True)

    @pl.when(k == pl.num_programs(1) - 1)
    def _():
        # Finalize once per output row-tile: mean-normalize, fused linear, bias.
        inv_deg = pl.reciprocal(jnp.maximum(deg_ref[...], 1.0), approx=True)
        agg = (acc_ref[...] * inv_deg).astype(jnp.bfloat16)          # [tm, F_pad]
        combined = jnp.concatenate([agg, xi_ref[...]], axis=-1)      # [tm, 2*F_pad]
        h = jnp.dot(combined, w_ref[...],
                    preferred_element_type=jnp.float32) + b_ref[...]
        if apply_relu:
            h = jnp.maximum(h, 0.0)
        out_ref[...] = h.astype(out_ref.dtype)


def _sage_layer(adj_p, x_p, w_stacked, b_pad, *, apply_relu, out_dtype, tm, tk):
    """adj_p: [N_pad, N_pad] bf16; x_p: [N_pad, F_pad] bf16;
    w_stacked: [2*F_pad, Fo_pad] bf16 ([W_l; W_r]); b_pad: [1, Fo_pad] f32."""
    n_pad = adj_p.shape[0]
    f_pad = x_p.shape[1]
    fo_pad = w_stacked.shape[1]
    grid = (n_pad // tm, n_pad // tk)

    kernel = functools.partial(_sage_layer_kernel, apply_relu=apply_relu)

    flops = 2 * n_pad * n_pad * f_pad + 2 * n_pad * (2 * f_pad) * fo_pad
    bytes_accessed = (adj_p.size * 2                      # bf16 adjacency (dominant)
                      + x_p.size * 2 * (grid[0] + 1)      # x re-read per row tile
                      + w_stacked.size * 2 + b_pad.size * 4
                      + n_pad * fo_pad * jnp.dtype(out_dtype).itemsize)
    cost = pl.CostEstimate(flops=int(flops), transcendentals=int(n_pad),
                           bytes_accessed=int(bytes_accessed))

    return pl.pallas_call(
        kernel,
        out_shape=jax.ShapeDtypeStruct((n_pad, fo_pad), out_dtype),
        grid_spec=pltpu.PrefetchScalarGridSpec(
            num_scalar_prefetch=0,
            grid=grid,
            in_specs=[
                pl.BlockSpec((tm, tk), lambda i, k: (i, k)),       # adj tile
                pl.BlockSpec((tk, f_pad), lambda i, k: (k, 0)),    # neighbor feats
                pl.BlockSpec((tm, f_pad), lambda i, k: (i, 0)),    # root feats
                pl.BlockSpec((2 * f_pad, fo_pad), lambda i, k: (0, 0)),  # [Wl; Wr]
                pl.BlockSpec((1, fo_pad), lambda i, k: (0, 0)),    # bias
            ],
            out_specs=pl.BlockSpec((tm, fo_pad), lambda i, k: (i, 0)),
            scratch_shapes=[
                pltpu.VMEM((tm, f_pad), jnp.float32),   # adj @ x accumulator
                pltpu.VMEM((tm, 1), jnp.float32),       # row-degree accumulator
            ],
        ),
        compiler_params=pltpu.CompilerParams(
            dimension_semantics=("parallel", "arbitrary"),
            vmem_limit_bytes=32 * 1024 * 1024,
        ),
        cost_estimate=cost,
    )(adj_p, x_p, x_p, w_stacked, b_pad)


# --------------------------------------------------------------------------
# Full forward: pad/stack once in the wrapper, then two tiled layer passes.
# --------------------------------------------------------------------------
def graphsage_forward(x, adj, params, *, tm=256, tk=256):
    """x: [N, F] float32, adj: [N, N] float32 dense 0/1 adjacency."""
    n, f = x.shape
    h = params["wl1"].shape[1]
    c = params["wl2"].shape[1]

    quantum = math.lcm(tm, tk)
    n_pad = _round_up(n, quantum)
    f_pad = _round_up(f, 128)
    h_pad = _round_up(h, 128)
    c_pad = _round_up(c, 128)

    # Padded, bf16 streaming copies (adj 0/1 is exact in bf16).
    adj_p = jnp.pad(adj, ((0, n_pad - n), (0, n_pad - n))).astype(jnp.bfloat16)
    x_p = jnp.pad(x, ((0, n_pad - n), (0, f_pad - f))).astype(jnp.bfloat16)

    def pad_w(w, r, cdim):
        return jnp.pad(w, ((0, r - w.shape[0]), (0, cdim - w.shape[1])))

    # Fuse lin_l / lin_r into one stacked weight per layer: [W_l ; W_r].
    w1 = jnp.concatenate([pad_w(params["wl1"], f_pad, h_pad),
                          pad_w(params["wr1"], f_pad, h_pad)],
                         axis=0).astype(jnp.bfloat16)          # [2*F_pad, H_pad]
    b1 = jnp.pad(params["b1"], ((0, 0), (0, h_pad - h))).astype(jnp.float32)
    w2 = jnp.concatenate([pad_w(params["wl2"], h_pad, c_pad),
                          pad_w(params["wr2"], h_pad, c_pad)],
                         axis=0).astype(jnp.bfloat16)          # [2*H_pad, C_pad]
    b2 = jnp.pad(params["b2"], ((0, 0), (0, c_pad - c))).astype(jnp.float32)

    # TODO(synk): dropout with p>0 (training mode) not implemented; p=0.0 -> identity.
    # Layer 1: ReLU(SAGEConv(x)); bf16 output feeds layer 2 directly.
    h1 = _sage_layer(adj_p, x_p, w1, b1, apply_relu=True,
                     out_dtype=jnp.bfloat16, tm=tm, tk=tk)      # [N_pad, H_pad]
    # Layer 2: SAGEConv(h1), f32 logits.
    out = _sage_layer(adj_p, h1, w2, b2, apply_relu=False,
                      out_dtype=jnp.float32, tm=tm, tk=tk)      # [N_pad, C_pad]
    return out[:n, :c]


# --------------------------------------------------------------------------
# Parameter init (PyG SAGEConv layout: lin_l with bias, lin_r without).
# --------------------------------------------------------------------------
def init_params(key, n_features, hidden_channels, n_classes):
    ks = jax.random.split(key, 4)

    def glorot(k, fan_in, fan_out):
        lim = (6.0 / (fan_in + fan_out)) ** 0.5
        return jax.random.uniform(k, (fan_in, fan_out), jnp.float32, -lim, lim)

    return {
        "wl1": glorot(ks[0], n_features, hidden_channels),   # lin_l (aggregated)
        "wr1": glorot(ks[1], n_features, hidden_channels),   # lin_r (root)
        "b1":  jnp.zeros((1, hidden_channels), jnp.float32),
        "wl2": glorot(ks[2], hidden_channels, n_classes),
        "wr2": glorot(ks[3], hidden_channels, n_classes),
        "b2":  jnp.zeros((1, n_classes), jnp.float32),
    }


def _reference(x, adj, params):
    """Plain-JAX f32 reference (PyG SAGEConv mean-aggregation semantics)."""
    deg = jnp.sum(adj, axis=-1, keepdims=True)
    inv = 1.0 / jnp.maximum(deg, 1.0)
    agg1 = (adj @ x) * inv
    h = jnp.maximum(agg1 @ params["wl1"] + x @ params["wr1"] + params["b1"], 0.0)
    agg2 = (adj @ h) * inv
    return agg2 @ params["wl2"] + h @ params["wr2"] + params["b2"]


if __name__ == "__main__":
    # Small synthetic problem: 640 nodes (-> 3x3 tile grid after padding to 768),
    # 16 input features, 32 hidden channels, 8 classes.
    N, F, H, C = 640, 16, 32, 8
    key = jax.random.PRNGKey(0)
    kx, kadj, kp = jax.random.split(key, 3)

    x = jax.random.normal(kx, (N, F), jnp.float32)
    # Deterministic random undirected 0/1 adjacency, no self loops.
    a = (jax.random.uniform(kadj, (N, N)) < 0.05).astype(jnp.float32)
    adj = jnp.clip(a + a.T, 0.0, 1.0) * (1.0 - jnp.eye(N, dtype=jnp.float32))

    params = init_params(kp, F, H, C)

    out = graphsage_forward(x, adj, params)
    out = jax.block_until_ready(out)

    assert out.shape == (N, C) and out.dtype == jnp.float32

    ref = _reference(x, adj, params)
    err = float(jnp.max(jnp.abs(out - ref)))
    # Loose tolerance: adj/x/h/W streamed in bf16 (adj exact, features ~0.4% rel).
    assert err < 0.15, f"max abs error vs f32 reference too large: {err}"

    print("KERNEL_OK")
</pallas_src>

<mosaic_0001>
module attributes {stable_mosaic.version = 11 : i64} {
  func.func @_sage_layer_kernel(%arg0: i32, %arg1: i32, %arg2: memref<256x256xbf16, #tpu.memory_space<vmem>>, %arg3: memref<256x128xbf16, #tpu.memory_space<vmem>>, %arg4: memref<256x128xbf16, #tpu.memory_space<vmem>>, %arg5: memref<256x128xbf16, #tpu.memory_space<vmem>>, %arg6: memref<1x128xf32, #tpu.memory_space<vmem>>, %arg7: memref<256x128xbf16, #tpu.memory_space<vmem>>, %arg8: memref<256x128xf32, #tpu.memory_space<vmem>>, %arg9: memref<256x1xf32, #tpu.memory_space<vmem>>) attributes {dimension_semantics = [#tpu.dimension_semantics<parallel>, #tpu.dimension_semantics<arbitrary>], iteration_bounds = array<i64: 3, 3>, scalar_prefetch = 0 : i64, scratch_operands = 2 : i64, tpu.core_type = #tpu.core_type<tc>, window_params = [{transform_indices = @transform_0, window_bounds = array<i64: 256, 256>}, {transform_indices = @transform_1, window_bounds = array<i64: 256, 128>}, {transform_indices = @transform_2, window_bounds = array<i64: 256, 128>}, {pipeline_mode = #tpu.pipeline_mode<synchronous>, transform_indices = @transform_3, window_bounds = array<i64: 256, 128>}, {pipeline_mode = #tpu.pipeline_mode<synchronous>, transform_indices = @transform_4, window_bounds = array<i64: 1, 128>}, {transform_indices = @transform_5, window_bounds = array<i64: 256, 128>}]} {
    %c0_i32 = arith.constant 0 : i32
    %0 = arith.cmpi eq, %arg1, %c0_i32 : i32
    %1 = arith.extui %0 : i1 to i32
    %c0_i32_0 = arith.constant 0 : i32
    %2 = arith.cmpi ne, %1, %c0_i32_0 : i32
    scf.if %2 {
      %cst_14 = arith.constant 0.000000e+00 : f32
      %18 = vector.broadcast %cst_14 : f32 to vector<256x128xf32>
      %c0_15 = arith.constant 0 : index
      %c0_16 = arith.constant 0 : index
      %19 = vector.load %arg8[%c0_15, %c0_16] : memref<256x128xf32, #tpu.memory_space<vmem>>, vector<256x128xf32>
      tpu.vector_store %arg8[%c0_15, %c0_16], %18 {strides = array<i32>} : memref<256x128xf32, #tpu.memory_space<vmem>>, vector<256x128xf32>,
      %cst_17 = arith.constant 0.000000e+00 : f32
      %20 = vector.broadcast %cst_17 : f32 to vector<256x1xf32>
      %c0_18 = arith.constant 0 : index
      %c0_19 = arith.constant 0 : index
      %21 = vector.load %arg9[%c0_18, %c0_19] : memref<256x1xf32, #tpu.memory_space<vmem>>, vector<256x1xf32>
      tpu.vector_store %arg9[%c0_18, %c0_19], %20 {strides = array<i32>} : memref<256x1xf32, #tpu.memory_space<vmem>>, vector<256x1xf32>,
    } else {
    }
    %c0 = arith.constant 0 : index
    %c0_1 = arith.constant 0 : index
    %3 = vector.load %arg2[%c0, %c0_1] : memref<256x256xbf16, #tpu.memory_space<vmem>>, vector<256x256xbf16>
    %c0_2 = arith.constant 0 : index
    %c0_3 = arith.constant 0 : index
    %4 = vector.load %arg8[%c0_2, %c0_3] : memref<256x128xf32, #tpu.memory_space<vmem>>, vector<256x128xf32>
    %c0_4 = arith.constant 0 : index
    %c0_5 = arith.constant 0 : index
    %5 = vector.load %arg3[%c0_4, %c0_5] : memref<256x128xbf16, #tpu.memory_space<vmem>>, vector<256x128xbf16>
    %cst = arith.constant dense<0.000000e+00> : vector<256x128xf32>
    %6 = tpu.matmul %3, %5, %cst {dimension_numbers = #tpu.dot_dimension_numbers<[1], [0], [0], [1], [0, 0, 1, 1], [], []>} : vector<256x256xbf16>, vector<256x128xbf16>, vector<256x128xf32> -> vector<256x128xf32>
    %7 = arith.addf %4, %6 : vector<256x128xf32>
    %c0_6 = arith.constant 0 : index
    %c0_7 = arith.constant 0 : index
    %8 = vector.load %arg8[%c0_6, %c0_7] : memref<256x128xf32, #tpu.memory_space<vmem>>, vector<256x128xf32>
    tpu.vector_store %arg8[%c0_6, %c0_7], %7 {strides = array<i32>} : memref<256x128xf32, #tpu.memory_space<vmem>>, vector<256x128xf32>,
    %c0_8 = arith.constant 0 : index
    %c0_9 = arith.constant 0 : index
    %9 = vector.load %arg9[%c0_8, %c0_9] : memref<256x1xf32, #tpu.memory_space<vmem>>, vector<256x1xf32>
    %10 = arith.extf %3 : vector<256x256xbf16> to vector<256x256xf32>
    %cst_10 = arith.constant dense<0.000000e+00> : vector<256xf32>
    %11 = vector.multi_reduction <add>, %10, %cst_10 [1] : vector<256x256xf32> to vector<256xf32>
    %12 = vector.shape_cast %11 : vector<256xf32> to vector<256x1xf32>
    %13 = arith.addf %9, %12 : vector<256x1xf32>
    %c0_11 = arith.constant 0 : index
    %c0_12 = arith.constant 0 : index
    %14 = vector.load %arg9[%c0_11, %c0_12] : memref<256x1xf32, #tpu.memory_space<vmem>>, vector<256x1xf32>
    tpu.vector_store %arg9[%c0_11, %c0_12], %13 {strides = array<i32>} : memref<256x1xf32, #tpu.memory_space<vmem>>, vector<256x1xf32>,
    %c2_i32 = arith.constant 2 : i32
    %15 = arith.cmpi eq, %arg1, %c2_i32 : i32
    %16 = arith.extui %15 : i1 to i32
    %c0_i32_13 = arith.constant 0 : i32
    %17 = arith.cmpi ne, %16, %c0_i32_13 : i32
    scf.if %17 {
      %c0_14 = arith.constant 0 : index
      %c0_15 = arith.constant 0 : index
      %18 = vector.load %arg9[%c0_14, %c0_15] : memref<256x1xf32, #tpu.memory_space<vmem>>, vector<256x1xf32>
      %cst_16 = arith.constant 1.000000e+00 : f32
      %19 = vector.broadcast %cst_16 : f32 to vector<256x1xf32>
      %20 = arith.maximumf %18, %19 : vector<256x1xf32>
      %21 = tpu.reciprocal %20 {approx = true} : vector<256x1xf32> -> vector<256x1xf32>
      %c0_17 = arith.constant 0 : index
      %c0_18 = arith.constant 0 : index
      %22 = vector.load %arg8[%c0_17, %c0_18] : memref<256x128xf32, #tpu.memory_space<vmem>>, vector<256x128xf32>
      %23 = vector.broadcast %21 : vector<256x1xf32> to vector<256x128xf32>
      %24 = arith.mulf %22, %23 : vector<256x128xf32>
      %25 = arith.truncf %24 : vector<256x128xf32> to vector<256x128xbf16>
      %c0_19 = arith.constant 0 : index
      %c0_20 = arith.constant 0 : index
      %26 = vector.load %arg4[%c0_19, %c0_20] : memref<256x128xbf16, #tpu.memory_space<vmem>>, vector<256x128xbf16>
      %27 = tpu.concatenate %25, %26 in 1 : vector<256x128xbf16>, vector<256x128xbf16> -> vector<256x256xbf16>
      %c0_21 = arith.constant 0 : index
      %c0_22 = arith.constant 0 : index
      %28 = vector.load %arg5[%c0_21, %c0_22] : memref<256x128xbf16, #tpu.memory_space<vmem>>, vector<256x128xbf16>
      %cst_23 = arith.constant dense<0.000000e+00> : vector<256x128xf32>
      %29 = tpu.matmul %27, %28, %cst_23 {dimension_numbers = #tpu.dot_dimension_numbers<[1], [0], [0], [1], [0, 0, 1, 1], [], []>} : vector<256x256xbf16>, vector<256x128xbf16>, vector<256x128xf32> -> vector<256x128xf32>
      %c0_24 = arith.constant 0 : index
      %c0_25 = arith.constant 0 : index
      %30 = vector.load %arg6[%c0_24, %c0_25] : memref<1x128xf32, #tpu.memory_space<vmem>>, vector<1x128xf32>
      %31 = vector.broadcast %30 : vector<1x128xf32> to vector<256x128xf32>
      %32 = arith.addf %29, %31 : vector<256x128xf32>
      %cst_26 = arith.constant 0.000000e+00 : f32
      %33 = vector.broadcast %cst_26 : f32 to vector<256x128xf32>
      %34 = arith.maximumf %32, %33 : vector<256x128xf32>
      %35 = arith.truncf %34 : vector<256x128xf32> to vector<256x128xbf16>
      %c0_27 = arith.constant 0 : index
      %c0_28 = arith.constant 0 : index
      %36 = vector.load %arg7[%c0_27, %c0_28] : memref<256x128xbf16, #tpu.memory_space<vmem>>, vector<256x128xbf16>
      tpu.vector_store %arg7[%c0_27, %c0_28], %35 {strides = array<i32>} : memref<256x128xbf16, #tpu.memory_space<vmem>>, vector<256x128xbf16>,
    } else {
    }
    return
  }
  func.func @transform_0(%arg0: i32, %arg1: i32) -> (i32, i32) {
    %c0_i32 = arith.constant 0 : i32
    return %arg0, %arg1 : i32, i32
  }
  func.func @transform_1(%arg0: i32, %arg1: i32) -> (i32, i32) {
    %c0_i32 = arith.constant 0 : i32
    %c0_i32_0 = arith.constant 0 : i32
    return %arg1, %c0_i32 : i32, i32
  }
  func.func @transform_2(%arg0: i32, %arg1: i32) -> (i32, i32) {
    %c0_i32 = arith.constant 0 : i32
    %c0_i32_0 = arith.constant 0 : i32
    return %arg0, %c0_i32 : i32, i32
  }
  func.func @transform_3(%arg0: i32, %arg1: i32) -> (i32, i32) {
    %c0_i32 = arith.constant 0 : i32
    %c0_i32_0 = arith.constant 0 : i32
    %c0_i32_1 = arith.constant 0 : i32
    return %c0_i32, %c0_i32_0 : i32, i32
  }
  func.func @transform_4(%arg0: i32, %arg1: i32) -> (i32, i32) {
    %c0_i32 = arith.constant 0 : i32
    %c0_i32_0 = arith.constant 0 : i32
    %c0_i32_1 = arith.constant 0 : i32
    return %c0_i32, %c0_i32_0 : i32, i32
  }
  func.func @transform_5(%arg0: i32, %arg1: i32) -> (i32, i32) {
    %c0_i32 = arith.constant 0 : i32
    %c0_i32_0 = arith.constant 0 : i32
    return %arg0, %c0_i32 : i32, i32
  }
}

</mosaic_0001>

<llo_original>
// kernel: tpu_custom_call.1
$region0: #{tpu_custom_call.1}
  #allocation0 [shape = 'u32[]', space=smem, size = 0x4, offset = 0x4, fixed_abs, tag = 'smem constant byte address 0x4 - core index']
  #allocation1 [shape = 'u32[144,128]{1,0:T(1,128)}', space=vmem, size = 0x12000, scoped, tag = 'internal scratch']
  #allocation2 [shape = 'f32[256,128]{1,0:T(8,128)}', space=vmem, size = 0x20000, scoped, tag = 'scratch operand']
  #allocation3 [shape = 'f32[256,1]{1,0:T(8,128)}', space=vmem, size = 0x20000, scoped, tag = 'scratch operand']
  %s0 = inlined_call_operand.hbm [shape: bf16[768,768], index: 0, kind: input, shape index: {}]
  %s1 = inlined_call_operand.hbm [shape: bf16[768,128], index: 1, kind: input, shape index: {}]
  %s2 = inlined_call_operand.hbm [shape: bf16[768,128], index: 2, kind: input, shape index: {}]
  %s3 = inlined_call_operand.hbm [shape: bf16[256,128], index: 3, kind: input, shape index: {}]
  %s4 = inlined_call_operand.hbm [shape: f32[1,128], index: 4, kind: input, shape index: {}]
  %s5 = inlined_call_operand.hbm [shape: bf16[768,128], index: 5, kind: output, shape index: {}]
  %s6 = sld [smem:[#allocation0]]
  $region81: #{tpu_custom_call.1} parent=0
    _
  %s8 = ssub.s32 1, %s6
  %s9 = scalar_select 0, %s8, %s6
  $region1: #{tpu_custom_call.1} parent=0
    #allocation4 [shape = 'u8[262144]{0}', space=vmem, size = 0x40000, scoped, tag = 'input window, operand 0']
    #allocation5 [shape = 's32[2]{0}', space=sflag, size = 0x8, scoped, tag = 'scoped memory for tpu_custom_call.1']
    #allocation6 [shape = 's32[2]{0}', space=sflag, size = 0x8, scoped, tag = 'scoped memory for tpu_custom_call.1']
    #allocation7 [shape = 'u8[131072]{0}', space=vmem, size = 0x20000, scoped, tag = 'input window, operand 1']
    #allocation8 [shape = 's32[2]{0}', space=sflag, size = 0x8, scoped, tag = 'scoped memory for tpu_custom_call.1']
    #allocation9 [shape = 'u8[131072]{0}', space=vmem, size = 0x20000, scoped, tag = 'input window, operand 2']
    #allocation10 [shape = 'u8[65536]{0}', space=vmem, size = 0x10000, scoped, tag = 'input window, operand 3, single buffered']
    #allocation11 [shape = 's32[1]{0}', space=sflag, size = 0x4, scoped, tag = 'scoped memory for tpu_custom_call.1']
    #allocation12 [shape = 'u8[512]{0}', space=vmem, size = 0x400, scoped, tag = 'input window, operand 4, single buffered']
    #allocation13 [shape = 'u8[131072]{0}', space=vmem, size = 0x20000, scoped, tag = 'output window, operand 0']
    %10 = vsyncpa [#allocation5], 0
    %s11 = scalar_lea.sflag [#allocation5], 1
    %12 = vsyncpa %s11, 0
    %13 = vsyncpa [#allocation8], 0
    %s14 = scalar_lea.sflag [#allocation8], 1
    %15 = vsyncpa %s14, 0
    %16 = vsyncpa [#allocation11], 0
    %17 = vsyncpa [#allocation6], 0
    %s18 = scalar_lea.sflag [#allocation6], 1
    %19 = vsyncpa %s18, 0
    loop: start=0, step=1, limit=11
    $region2: #{tpu_custom_call.1} parent=1 // loop_pre_header
      _
    $region3: #{tpu_custom_call.1} parent=1 // loop_header
      %s21 = sphi 0, %s25
      %p22 = scmp.ge.s32.totalorder %s21, 11
      %s28 = sphi 0, %s40
      %s29 = sphi 0, %s36
      %s30 = sphi 0, %s28
      %s31 = sphi 0, %s29
      %s32 = sphi 0, %s30
      %s33 = sphi 0, %s31
      %s45 = sphi 0, %s47
      %s48 = sphi 0, %s45
      %s49 = sphi 0, %s48
      %s65 = sphi 0, %s49
      %s71 = sphi 0, %s73
      %s74 = sphi 0, %s71
      %s75 = sphi 0, %s74
      %s91 = sphi 0, %s75
      %s97 = sphi 0, %s99
      %s100 = sphi 0, %s97
      %s101 = sphi 0, %s100
      %s117 = sphi 0, %s101
      %s121 = sphi 0, %s121
      %s123 = sphi 0, %s121
      %s124 = sphi 0, %s123
      %s138 = sphi 0, %s124
      %s142 = sphi 0, %s142
      %s144 = sphi 0, %s142
      %s145 = sphi 0, %s144
      %s159 = sphi 0, %s145
      %s165 = sphi 0, %s167
      %s168 = sphi 0, %s165
      %s169 = sphi 0, %s168
      %s185 = sphi 0, %s169
    $region4: #{tpu_custom_call.1} parent=1 // loop_header_branch
      %24 = sbr.rel (%p22) target = $region8
    $region5: #{tpu_custom_call.1} parent=1 // loop_body
      %s26 = ssub.s32 %s21, 1
      %s27 = ssub.s32 %s21, 2
      %s34 = sadd.s32 1, %s29
      %p35 = scmp.ge.s32.totalorder %s34, 3
      %s36 = scalar_select %p35, 0, %s34
      %s37 = sadd.s32 1, %s28
      %s38 = scalar_select %p35, %s37, %s28
      %p39 = scmp.ge.s32.totalorder %s38, 3
      %s40 = scalar_select %p39, 0, %s38
      %s41 = ssub.s32 %s28, %s40
      %s42 = ssub.s32 %s29, %s36
      %s43 = sor.u32 %s41, %s42
      %p44 = scmp.eq.s32.totalorder %s43, 0
      %s46 = sadd.s32 %s45, 1
      %s47 = scalar_select %p44, %s45, %s46
      %p50 = pneg %p44
      %p51 = scmp.eq.s32.totalorder %s21, 8
      %p52 = por %p50, %p51
      %p53 = scmp.ne.s32.totalorder %s45, %s48
      %p54 = scmp.eq.s32.totalorder %s21, 0
      %p55 = por %p53, %p54
      %p56 = scmp.ne.s32.totalorder %s45, %s48
      %p57 = scmp.eq.s32.totalorder %s26, 8
      %p58 = por %p56, %p57
      %p59 = scmp.ne.s32.totalorder %s48, %s49
      %p60 = scmp.eq.s32.totalorder %s26, 0
      %p61 = por %p59, %p60
      %p62 = scmp.ne.s32.totalorder %s48, %s49
      %p63 = scmp.eq.s32.totalorder %s27, 8
      %p64 = por %p62, %p63
      %p66 = scmp.ne.s32.totalorder %s49, %s65
      %p67 = scmp.eq.s32.totalorder %s27, 0
      %p68 = por %p66, %p67
      %s69 = ssub.s32 %s29, %s36
      %p70 = scmp.eq.s32.totalorder %s69, 0
      %s72 = sadd.s32 %s71, 1
      %s73 = scalar_select %p70, %s71, %s72
      %p76 = pneg %p70
      %p77 = scmp.eq.s32.totalorder %s21, 8
      %p78 = por %p76, %p77
      %p79 = scmp.ne.s32.totalorder %s71, %s74
      %p80 = scmp.eq.s32.totalorder %s21, 0
      %p81 = por %p79, %p80
      %p82 = scmp.ne.s32.totalorder %s71, %s74
      %p83 = scmp.eq.s32.totalorder %s26, 8
      %p84 = por %p82, %p83
      %p85 = scmp.ne.s32.totalorder %s74, %s75
      %p86 = scmp.eq.s32.totalorder %s26, 0
      %p87 = por %p85, %p86
      %p88 = scmp.ne.s32.totalorder %s74, %s75
      %p89 = scmp.eq.s32.totalorder %s27, 8
      %p90 = por %p88, %p89
      %p92 = scmp.ne.s32.totalorder %s75, %s91
      %p93 = scmp.eq.s32.totalorder %s27, 0
      %p94 = por %p92, %p93
      %s95 = ssub.s32 %s28, %s40
      %p96 = scmp.eq.s32.totalorder %s95, 0
      %s98 = sadd.s32 %s97, 1
      %s99 = scalar_select %p96, %s97, %s98
      %p102 = pneg %p96
      %p103 = scmp.eq.s32.totalorder %s21, 8
      %p104 = por %p102, %p103
      %p105 = scmp.ne.s32.totalorder %s97, %s100
      %p106 = scmp.eq.s32.totalorder %s21, 0
      %p107 = por %p105, %p106
      %p108 = scmp.ne.s32.totalorder %s97, %s100
      %p109 = scmp.eq.s32.totalorder %s26, 8
      %p110 = por %p108, %p109
      %p111 = scmp.ne.s32.totalorder %s100, %s101
      %p112 = scmp.eq.s32.totalorder %s26, 0
      %p113 = por %p111, %p112
      %p114 = scmp.ne.s32.totalorder %s100, %s101
      %p115 = scmp.eq.s32.totalorder %s27, 8
      %p116 = por %p114, %p115
      %p118 = scmp.ne.s32.totalorder %s101, %s117
      %p119 = scmp.eq.s32.totalorder %s27, 0
      %p120 = por %p118, %p119
      %s122 = sadd.s32 %s121, 1
      %p125 = scmp.eq.s32.totalorder %s21, 8
      %p126 = scmp.ne.s32.totalorder %s121, %s123
      %p127 = scmp.eq.s32.totalorder %s21, 0
      %p128 = por %p126, %p127
      %p129 = scmp.ne.s32.totalorder %s121, %s123
      %p130 = scmp.eq.s32.totalorder %s26, 8
      %p131 = por %p129, %p130
      %p132 = scmp.ne.s32.totalorder %s123, %s124
      %p133 = scmp.eq.s32.totalorder %s26, 0
      %p134 = por %p132, %p133
      %p135 = scmp.ne.s32.totalorder %s123, %s124
      %p136 = scmp.eq.s32.totalorder %s27, 8
      %p137 = por %p135, %p136
      %p139 = scmp.ne.s32.totalorder %s124, %s138
      %p140 = scmp.eq.s32.totalorder %s27, 0
      %p141 = por %p139, %p140
      %s143 = sadd.s32 %s142, 1
      %p146 = scmp.eq.s32.totalorder %s21, 8
      %p147 = scmp.ne.s32.totalorder %s142, %s144
      %p148 = scmp.eq.s32.totalorder %s21, 0
      %p149 = por %p147, %p148
      %p150 = scmp.ne.s32.totalorder %s142, %s144
      %p151 = scmp.eq.s32.totalorder %s26, 8
      %p152 = por %p150, %p151
      %p153 = scmp.ne.s32.totalorder %s144, %s145
      %p154 = scmp.eq.s32.totalorder %s26, 0
      %p155 = por %p153, %p154
      %p156 = scmp.ne.s32.totalorder %s144, %s145
      %p157 = scmp.eq.s32.totalorder %s27, 8
      %p158 = por %p156, %p157
      %p160 = scmp.ne.s32.totalorder %s145, %s159
      %p161 = scmp.eq.s32.totalorder %s27, 0
      %p162 = por %p160, %p161
      %s163 = ssub.s32 %s28, %s40
      %p164 = scmp.eq.s32.totalorder %s163, 0
      %s166 = sadd.s32 %s165, 1
      %s167 = scalar_select %p164, %s165, %s166
      %p170 = pneg %p164
      %p171 = scmp.eq.s32.totalorder %s21, 8
      %p172 = por %p170, %p171
      %p173 = scmp.ne.s32.totalorder %s165, %s168
      %p174 = scmp.eq.s32.totalorder %s21, 0
      %p175 = por %p173, %p174
      %p176 = scmp.ne.s32.totalorder %s165, %s168
      %p177 = scmp.eq.s32.totalorder %s26, 8
      %p178 = por %p176, %p177
      %p179 = scmp.ne.s32.totalorder %s168, %s169
      %p180 = scmp.eq.s32.totalorder %s26, 0
      %p181 = por %p179, %p180
      %p182 = scmp.ne.s32.totalorder %s168, %s169
      %p183 = scmp.eq.s32.totalorder %s27, 8
      %p184 = por %p182, %p183
      %p186 = scmp.ne.s32.totalorder %s169, %s185
      %p187 = scmp.eq.s32.totalorder %s27, 0
      %p188 = por %p186, %p187
      %p189 = scmp.le.s32.totalorder 1, %s21
      %p190 = scmp.lt.s32.totalorder %s21, 10
      %p191 = pnand %p189, %p190
      %p192 = pneg %p191
      // Predicated region
      $region9: #{tpu_custom_call.1} parent=5 // pred_check
        _
      $region10: #{tpu_custom_call.1} parent=5 // pred_check_branch
        %194 = sbr.rel (%p191) target = $region12
      $region11: #{tpu_custom_call.1} parent=5 // pred_region
        %s195 = ssub.s32 %s21, 1
        // Predicated region
        $region13: #{tpu_custom_call.1} parent=11 // pred_check
          %p196 = pneg %p134
        $region14: #{tpu_custom_call.1} parent=11 // pred_check_branch
          %198 = sbr.rel (%p196) target = $region16
        $region15: #{tpu_custom_call.1} parent=11 // pred_region
          %s200 = ssub.s32 2048, 2048
          %201 = vsyncadd [#allocation11], %s200
          %s202 = sshll.u32 [#allocation10], 4
          %s203 = int_to_ptr.vmem [resolvable:$true] %s202
          %208 = dma.hbm_to_vmem [thread:$0]  %s3, 2048, %s203, [#allocation11], 64, 64, 4
        $region16: #{tpu_custom_call.1} parent=11 // pred_fallthru
          _
        // Predicated region
        $region17: #{tpu_custom_call.1} parent=11 // pred_check
          %p209 = pneg %p155
        $region18: #{tpu_custom_call.1} parent=11 // pred_check_branch
          %211 = sbr.rel (%p209) target = $region20
        $region19: #{tpu_custom_call.1} parent=11 // pred_region
          %s213 = ssub.s32 16, 16
          %214 = vsyncadd [#allocation11], %s213
          %s216 = sshll.u32 [#allocation12], 4
          %s217 = int_to_ptr.vmem [resolvable:$true] %s216
          %219 = dma.hbm_to_vmem [thread:$0]  %s4, 16, %s217, [#allocation11]
        $region20: #{tpu_custom_call.1} parent=11 // pred_fallthru
          _
      $region12: #{tpu_custom_call.1} parent=5 // pred_fallthru
        _
      %p220 = scmp.lt.s32.totalorder %s21, 9
      // Predicated region
      $region21: #{tpu_custom_call.1} parent=5 // pred_check
        %p221 = pneg %p220
      $region22: #{tpu_custom_call.1} parent=5 // pred_check_branch
        %223 = sbr.rel (%p221) target = $region24
      $region23: #{tpu_custom_call.1} parent=5 // pred_region
        // Predicated region
        $region25: #{tpu_custom_call.1} parent=23 // pred_check
          %p224 = pneg %p55
        $region26: #{tpu_custom_call.1} parent=23 // pred_check_branch
          %226 = sbr.rel (%p224) target = $region28
        $region27: #{tpu_custom_call.1} parent=23 // pred_region
          %s227 = sand.u32 %s45, 1
          %s228 = scalar_lea.sflag [#allocation5], %s227
          %s229 = sand.u32 %s45, 1
          %s230 = smul.addr %s229, 256
          %s231 = scalar_lea.vmem [#allocation4], %s230
          %s232 = smul.u32 32, %s28
          %s233 = smul.u32 2, %s29
          %s235 = ssub.s32 4096, 4096
          %236 = vsyncadd %s228, %s235
          %s237 = smul.addr %s232, 6
          %s238 = sadd.s32 %s233, %s237
          %s239 = smul.addr %s238, 64
          %s240 = scalar_lea.hbm %s0, %s239
          %s241 = sshll.u32 %s231, 4
          %s242 = int_to_ptr.vmem [resolvable:$true] %s241
          %247 = dma.hbm_to_vmem [thread:$0]  %s240, 4096, %s242, %s228, 384, 128, 8
        $region28: #{tpu_custom_call.1} parent=23 // pred_fallthru
          _
        // Predicated region
        $region29: #{tpu_custom_call.1} parent=23 // pred_check
          %p248 = pneg %p81
        $region30: #{tpu_custom_call.1} parent=23 // pred_check_branch
          %250 = sbr.rel (%p248) target = $region32
        $region31: #{tpu_custom_call.1} parent=23 // pred_region
          %s251 = sand.u32 %s21, 1
          %s252 = scalar_lea.sflag [#allocation8], %s251
          %s253 = sand.u32 %s71, 1
          %s254 = smul.addr %s253, 128
          %s255 = scalar_lea.vmem [#allocation7], %s254
          %s256 = smul.u32 32, %s29
          %s258 = ssub.s32 2048, 2048
          %259 = vsyncadd %s252, %s258
          %s260 = smul.addr %s256, 64
          %s261 = scalar_lea.hbm %s1, %s260
          %s262 = sshll.u32 %s255, 4
          %s263 = int_to_ptr.vmem [resolvable:$true] %s262
          %268 = dma.hbm_to_vmem [thread:$0]  %s261, 2048, %s263, %s252, 64, 64, 4
        $region32: #{tpu_custom_call.1} parent=23 // pred_fallthru
          _
        // Predicated region
        $region33: #{tpu_custom_call.1} parent=23 // pred_check
          %p269 = pneg %p107
        $region34: #{tpu_custom_call.1} parent=23 // pred_check_branch
          %271 = sbr.rel (%p269) target = $region36
        $region35: #{tpu_custom_call.1} parent=23 // pred_region
          %s272 = sand.u32 %s21, 1
          %s273 = scalar_lea.sflag [#allocation8], %s272
          %s274 = sand.u32 %s97, 1
          %s275 = smul.addr %s274, 128
          %s276 = scalar_lea.vmem [#allocation9], %s275
          %s277 = smul.u32 32, %s28
          %s279 = ssub.s32 2048, 2048
          %280 = vsyncadd %s273, %s279
          %s281 = smul.addr %s277, 64
          %s282 = scalar_lea.hbm %s2, %s281
          %s283 = sshll.u32 %s276, 4
          %s284 = int_to_ptr.vmem [resolvable:$true] %s283
          %289 = dma.hbm_to_vmem [thread:$0]  %s282, 2048, %s284, %s273, 64, 64, 4
        $region36: #{tpu_custom_call.1} parent=23 // pred_fallthru
          _
      $region24: #{tpu_custom_call.1} parent=5 // pred_fallthru
        _
      %p290 = scmp.le.s32.totalorder 1, %s21
      %p291 = scmp.lt.s32.totalorder %s21, 10
      %p292 = pnand %p290, %p291
      %p293 = pneg %p292
      // Predicated region
      $region37: #{tpu_custom_call.1} parent=5 // pred_check
        _
      $region38: #{tpu_custom_call.1} parent=5 // pred_check_branch
        %295 = sbr.rel (%p292) target = $region40
      $region39: #{tpu_custom_call.1} parent=5 // pred_region
        %s296 = ssub.s32 %s21, 1
        %s297 = sand.u32 %s48, 1
        %s298 = scalar_lea.sflag [#allocation5], %s297
        %s299 = sand.u32 %s48, 1
        %s300 = smul.addr %s299, 256
        %s301 = scalar_lea.vmem [#allocation4], %s300
        // Predicated region
        $region41: #{tpu_custom_call.1} parent=39 // pred_check
          %p302 = pneg %p61
        $region42: #{tpu_custom_call.1} parent=39 // pred_check_branch
          %304 = sbr.rel (%p302) target = $region44
        $region43: #{tpu_custom_call.1} parent=39 // pred_region
          %305 = dma.done %s298, 4096
        $region44: #{tpu_custom_call.1} parent=39 // pred_fallthru
          _
        %s306 = sand.u32 %s26, 1
        %s307 = scalar_lea.sflag [#allocation8], %s306
        %s308 = sand.u32 %s74, 1
        %s309 = smul.addr %s308, 128
        %s310 = scalar_lea.vmem [#allocation7], %s309
        // Predicated region
        $region45: #{tpu_custom_call.1} parent=39 // pred_check
          %p311 = pneg %p87
        $region46: #{tpu_custom_call.1} parent=39 // pred_check_branch
          %313 = sbr.rel (%p311) target = $region48
        $region47: #{tpu_custom_call.1} parent=39 // pred_region
          %314 = dma.done %s307, 2048
        $region48: #{tpu_custom_call.1} parent=39 // pred_fallthru
          _
        %s315 = sand.u32 %s26, 1
        %s316 = scalar_lea.sflag [#allocation8], %s315
        %s317 = sand.u32 %s100, 1
        %s318 = smul.addr %s317, 128
        %s319 = scalar_lea.vmem [#allocation9], %s318
        // Predicated region
        $region49: #{tpu_custom_call.1} parent=39 // pred_check
          %p320 = pneg %p113
        $region50: #{tpu_custom_call.1} parent=39 // pred_check_branch
          %322 = sbr.rel (%p320) target = $region52
        $region51: #{tpu_custom_call.1} parent=39 // pred_region
          %323 = dma.done %s316, 2048
        $region52: #{tpu_custom_call.1} parent=39 // pred_fallthru
          _
        // Predicated region
        $region53: #{tpu_custom_call.1} parent=39 // pred_check
          %p324 = pneg %p134
        $region54: #{tpu_custom_call.1} parent=39 // pred_check_branch
          %326 = sbr.rel (%p324) target = $region56
        $region55: #{tpu_custom_call.1} parent=39 // pred_region
          %327 = dma.done [#allocation11], 2048
        $region56: #{tpu_custom_call.1} parent=39 // pred_fallthru
          _
        // Predicated region
        $region57: #{tpu_custom_call.1} parent=39 // pred_check
          %p328 = pneg %p155
        $region58: #{tpu_custom_call.1} parent=39 // pred_check_branch
          %330 = sbr.rel (%p328) target = $region60
        $region59: #{tpu_custom_call.1} parent=39 // pred_region
          %331 = dma.done [#allocation11], 16
        $region60: #{tpu_custom_call.1} parent=39 // pred_fallthru
          _
        %s332 = sand.u32 %s48, 1
        %s333 = scalar_lea.sflag [#allocation5], %s332
        %s334 = sand.u32 %s48, 1
        %s335 = smul.addr %s334, 256
        %s336 = scalar_lea.vmem [#allocation4], %s335
        %p337 = pneg %p61
        %p338 = pneg %p58
        %s339 = sand.u32 %s26, 1
        %s340 = scalar_lea.sflag [#allocation8], %s339
        %s341 = sand.u32 %s74, 1
        %s342 = smul.addr %s341, 128
        %s343 = scalar_lea.vmem [#allocation7], %s342
        %p344 = pneg %p87
        %p345 = pneg %p84
        %s346 = sand.u32 %s26, 1
        %s347 = scalar_lea.sflag [#allocation8], %s346
        %s348 = sand.u32 %s100, 1
        %s349 = smul.addr %s348, 128
        %s350 = scalar_lea.vmem [#allocation9], %s349
        %p351 = pneg %p113
        %p352 = pneg %p110
        %p353 = pneg %p134
        %p354 = pneg %p131
        %p355 = pneg %p155
        %p356 = pneg %p152
        %p357 = pneg %p181
        %p358 = pneg %p178
        %s359 = sand.u32 %s168, 1
        %s360 = scalar_lea.sflag [#allocation6], %s359
        %s361 = sand.u32 %s168, 1
        %s362 = smul.addr %s361, 128
        %s363 = scalar_lea.vmem [#allocation13], %s362
        %s364 = smul.u32 32, %s30
        %s365 = smul.u32 2, %s31
        %s366 = smul.u32 32, %s31
        %s367 = smul.u32 32, %s30
        %s368 = smul.u32 32, %s30
        %p370 = scmp.eq.s32.totalorder %s31, 0
        // Predicated region
        $region61: #{tpu_custom_call.1} parent=39 // pred_check
          %p371 = pneg %p370
        $region62: #{tpu_custom_call.1} parent=39 // pred_check_branch
          %373 = sbr.rel (%p371) target = $region64
        $region63: #{tpu_custom_call.1} parent=39 // pred_region
          %374 = vst [vmem:[#allocation2] sm:$0xff] 0.0
          %375 = vst [vmem:[#allocation2 + $0x8] sm:$0xff] 0.0
          %376 = vst [vmem:[#allocation2 + $0x10] sm:$0xff] 0.0
          %377 = vst [vmem:[#allocation2 + $0x18] sm:$0xff] 0.0
          %378 = vst [vmem:[#allocation2 + $0x20] sm:$0xff] 0.0
          %379 = vst [vmem:[#allocation2 + $0x28] sm:$0xff] 0.0
          %380 = vst [vmem:[#allocation2 + $0x30] sm:$0xff] 0.0
          %381 = vst [vmem:[#allocation2 + $0x38] sm:$0xff] 0.0
          %382 = vst [vmem:[#allocation2 + $0x40] sm:$0xff] 0.0
          %383 = vst [vmem:[#allocation2 + $0x48] sm:$0xff] 0.0
          %384 = vst [vmem:[#allocation2 + $0x50] sm:$0xff] 0.0
          %385 = vst [vmem:[#allocation2 + $0x58] sm:$0xff] 0.0
          %386 = vst [vmem:[#allocation2 + $0x60] sm:$0xff] 0.0
          %387 = vst [vmem:[#allocation2 + $0x68] sm:$0xff] 0.0
          %388 = vst [vmem:[#allocation2 + $0x70] sm:$0xff] 0.0
          %389 = vst [vmem:[#allocation2 + $0x78] sm:$0xff] 0.0
          %390 = vst [vmem:[#allocation2 + $0x80] sm:$0xff] 0.0
          %391 = vst [vmem:[#allocation2 + $0x88] sm:$0xff] 0.0
          %392 = vst [vmem:[#allocation2 + $0x90] sm:$0xff] 0.0
          %393 = vst [vmem:[#allocation2 + $0x98] sm:$0xff] 0.0
          %394 = vst [vmem:[#allocation2 + $0xa0] sm:$0xff] 0.0
          %395 = vst [vmem:[#allocation2 + $0xa8] sm:$0xff] 0.0
          %396 = vst [vmem:[#allocation2 + $0xb0] sm:$0xff] 0.0
          %397 = vst [vmem:[#allocation2 + $0xb8] sm:$0xff] 0.0
          %398 = vst [vmem:[#allocation2 + $0xc0] sm:$0xff] 0.0
          %399 = vst [vmem:[#allocation2 + $0xc8] sm:$0xff] 0.0
          %400 = vst [vmem:[#allocation2 + $0xd0] sm:$0xff] 0.0
          %401 = vst [vmem:[#allocation2 + $0xd8] sm:$0xff] 0.0
          %402 = vst [vmem:[#allocation2 + $0xe0] sm:$0xff] 0.0
          %403 = vst [vmem:[#allocation2 + $0xe8] sm:$0xff] 0.0
          %404 = vst [vmem:[#allocation2 + $0xf0] sm:$0xff] 0.0
          %405 = vst [vmem:[#allocation2 + $0xf8] sm:$0xff] 0.0
          %vm406 = vcmask 7168
          %407 = vst.msk [vmem:[#allocation3] sm:$0xff] %vm406, 0.0
          %408 = vst.msk [vmem:[#allocation3 + $0x8] sm:$0xff] %vm406, 0.0
          %409 = vst.msk [vmem:[#allocation3 + $0x10] sm:$0xff] %vm406, 0.0
          %410 = vst.msk [vmem:[#allocation3 + $0x18] sm:$0xff] %vm406, 0.0
          %411 = vst.msk [vmem:[#allocation3 + $0x20] sm:$0xff] %vm406, 0.0
          %412 = vst.msk [vmem:[#allocation3 + $0x28] sm:$0xff] %vm406, 0.0
          %413 = vst.msk [vmem:[#allocation3 + $0x30] sm:$0xff] %vm406, 0.0
          %414 = vst.msk [vmem:[#allocation3 + $0x38] sm:$0xff] %vm406, 0.0
          %415 = vst.msk [vmem:[#allocation3 + $0x40] sm:$0xff] %vm406, 0.0
          %416 = vst.msk [vmem:[#allocation3 + $0x48] sm:$0xff] %vm406, 0.0
          %417 = vst.msk [vmem:[#allocation3 + $0x50] sm:$0xff] %vm406, 0.0
          %418 = vst.msk [vmem:[#allocation3 + $0x58] sm:$0xff] %vm406, 0.0
          %419 = vst.msk [vmem:[#allocation3 + $0x60] sm:$0xff] %vm406, 0.0
          %420 = vst.msk [vmem:[#allocation3 + $0x68] sm:$0xff] %vm406, 0.0
          %421 = vst.msk [vmem:[#allocation3 + $0x70] sm:$0xff] %vm406, 0.0
          %422 = vst.msk [vmem:[#allocation3 + $0x78] sm:$0xff] %vm406, 0.0
          %423 = vst.msk [vmem:[#allocation3 + $0x80] sm:$0xff] %vm406, 0.0
          %424 = vst.msk [vmem:[#allocation3 + $0x88] sm:$0xff] %vm406, 0.0
          %425 = vst.msk [vmem:[#allocation3 + $0x90] sm:$0xff] %vm406, 0.0
          %426 = vst.msk [vmem:[#allocation3 + $0x98] sm:$0xff] %vm406, 0.0
          %427 = vst.msk [vmem:[#allocation3 + $0xa0] sm:$0xff] %vm406, 0.0
          %428 = vst.msk [vmem:[#allocation3 + $0xa8] sm:$0xff] %vm406, 0.0
          %429 = vst.msk [vmem:[#allocation3 + $0xb0] sm:$0xff] %vm406, 0.0
          %430 = vst.msk [vmem:[#allocation3 + $0xb8] sm:$0xff] %vm406, 0.0
          %431 = vst.msk [vmem:[#allocation3 + $0xc0] sm:$0xff] %vm406, 0.0
          %432 = vst.msk [vmem:[#allocation3 + $0xc8] sm:$0xff] %vm406, 0.0
          %433 = vst.msk [vmem:[#allocation3 + $0xd0] sm:$0xff] %vm406, 0.0
          %434 = vst.msk [vmem:[#allocation3 + $0xd8] sm:$0xff] %vm406, 0.0
          %435 = vst.msk [vmem:[#allocation3 + $0xe0] sm:$0xff] %vm406, 0.0
          %436 = vst.msk [vmem:[#allocation3 + $0xe8] sm:$0xff] %vm406, 0.0
          %437 = vst.msk [vmem:[#allocation3 + $0xf0] sm:$0xff] %vm406, 0.0
          %438 = vst.msk [vmem:[#allocation3 + $0xf8] sm:$0xff] %vm406, 0.0
        $region64: #{tpu_custom_call.1} parent=39 // pred_fallthru
          _
        %v439 = vld [vmem:[%s301] sm:$0xff]
        %v440 = vld [vmem:[%s301 + $0x8] sm:$0xff]
        %v441 = vld [vmem:[%s301 + $0x10] sm:$0xff]
        %v442 = vld [vmem:[%s301 + $0x18] sm:$0xff]
        %v443 = vld [vmem:[%s301 + $0x20] sm:$0xff]
        %v444 = vld [vmem:[%s301 + $0x28] sm:$0xff]
        %v445 = vld [vmem:[%s301 + $0x30] sm:$0xff]
        %v446 = vld [vmem:[%s301 + $0x38] sm:$0xff]
        %v447 = vld [vmem:[%s301 + $0x40] sm:$0xff]
        %v448 = vld [vmem:[%s301 + $0x48] sm:$0xff]
        %v449 = vld [vmem:[%s301 + $0x50] sm:$0xff]
        %v450 = vld [vmem:[%s301 + $0x58] sm:$0xff]
        %v451 = vld [vmem:[%s301 + $0x60] sm:$0xff]
        %v452 = vld [vmem:[%s301 + $0x68] sm:$0xff]
        %v453 = vld [vmem:[%s301 + $0x70] sm:$0xff]
        %v454 = vld [vmem:[%s301 + $0x78] sm:$0xff]
        %v455 = vld [vmem:[%s301 + $0x80] sm:$0xff]
        %v456 = vld [vmem:[%s301 + $0x88] sm:$0xff]
        %v457 = vld [vmem:[%s301 + $0x90] sm:$0xff]
        %v458 = vld [vmem:[%s301 + $0x98] sm:$0xff]
        %v459 = vld [vmem:[%s301 + $0xa0] sm:$0xff]
        %v460 = vld [vmem:[%s301 + $0xa8] sm:$0xff]
        %v461 = vld [vmem:[%s301 + $0xb0] sm:$0xff]
        %v462 = vld [vmem:[%s301 + $0xb8] sm:$0xff]
        %v463 = vld [vmem:[%s301 + $0xc0] sm:$0xff]
        %v464 = vld [vmem:[%s301 + $0xc8] sm:$0xff]
        %v465 = vld [vmem:[%s301 + $0xd0] sm:$0xff]
        %v466 = vld [vmem:[%s301 + $0xd8] sm:$0xff]
        %v467 = vld [vmem:[%s301 + $0xe0] sm:$0xff]
        %v468 = vld [vmem:[%s301 + $0xe8] sm:$0xff]
        %v469 = vld [vmem:[%s301 + $0xf0] sm:$0xff]
        %v470 = vld [vmem:[%s301 + $0xf8] sm:$0xff]
        %v471 = vld [vmem:[#allocation2] sm:$0xff]
        %v472 = vld [vmem:[#allocation2 + $0x8] sm:$0xff]
        %v473 = vld [vmem:[#allocation2 + $0x10] sm:$0xff]
        %v474 = vld [vmem:[#allocation2 + $0x18] sm:$0xff]
        %v475 = vld [vmem:[#allocation2 + $0x20] sm:$0xff]
        %v476 = vld [vmem:[#allocation2 + $0x28] sm:$0xff]
        %v477 = vld [vmem:[#allocation2 + $0x30] sm:$0xff]
        %v478 = vld [vmem:[#allocation2 + $0x38] sm:$0xff]
        %v479 = vld [vmem:[#allocation2 + $0x40] sm:$0xff]
        %v480 = vld [vmem:[#allocation2 + $0x48] sm:$0xff]
        %v481 = vld [vmem:[#allocation2 + $0x50] sm:$0xff]
        %v482 = vld [vmem:[#allocation2 + $0x58] sm:$0xff]
        %v483 = vld [vmem:[#allocation2 + $0x60] sm:$0xff]
        %v484 = vld [vmem:[#allocation2 + $0x68] sm:$0xff]
        %v485 = vld [vmem:[#allocation2 + $0x70] sm:$0xff]
        %v486 = vld [vmem:[#allocation2 + $0x78] sm:$0xff]
        %v487 = vld [vmem:[#allocation2 + $0x80] sm:$0xff]
        %v488 = vld [vmem:[#allocation2 + $0x88] sm:$0xff]
        %v489 = vld [vmem:[#allocation2 + $0x90] sm:$0xff]
        %v490 = vld [vmem:[#allocation2 + $0x98] sm:$0xff]
        %v491 = vld [vmem:[#allocation2 + $0xa0] sm:$0xff]
        %v492 = vld [vmem:[#allocation2 + $0xa8] sm:$0xff]
        %v493 = vld [vmem:[#allocation2 + $0xb0] sm:$0xff]
        %v494 = vld [vmem:[#allocation2 + $0xb8] sm:$0xff]
        %v495 = vld [vmem:[#allocation2 + $0xc0] sm:$0xff]
        %v496 = vld [vmem:[#allocation2 + $0xc8] sm:$0xff]
        %v497 = vld [vmem:[#allocation2 + $0xd0] sm:$0xff]
        %v498 = vld [vmem:[#allocation2 + $0xd8] sm:$0xff]
        %v499 = vld [vmem:[#allocation2 + $0xe0] sm:$0xff]
        %v500 = vld [vmem:[#allocation2 + $0xe8] sm:$0xff]
        %v501 = vld [vmem:[#allocation2 + $0xf0] sm:$0xff]
        %v502 = vld [vmem:[#allocation2 + $0xf8] sm:$0xff]
        %v503 = vld [vmem:[%s310] sm:$0xf]
        %v504 = vld [vmem:[%s310 + $0x4] sm:$0xf]
        %v505 = vld [vmem:[%s310 + $0x8] sm:$0xf]
        %v506 = vld [vmem:[%s310 + $0xc] sm:$0xf]
        %v507 = vld [vmem:[%s310 + $0x10] sm:$0xf]
        %v508 = vld [vmem:[%s310 + $0x14] sm:$0xf]
        %v509 = vld [vmem:[%s310 + $0x18] sm:$0xf]
        %v510 = vld [vmem:[%s310 + $0x1c] sm:$0xf]
        %v511 = vld [vmem:[%s310 + $0x20] sm:$0xf]
        %v512 = vld [vmem:[%s310 + $0x24] sm:$0xf]
        %v513 = vld [vmem:[%s310 + $0x28] sm:$0xf]
        %v514 = vld [vmem:[%s310 + $0x2c] sm:$0xf]
        %v515 = vld [vmem:[%s310 + $0x30] sm:$0xf]
        %v516 = vld [vmem:[%s310 + $0x34] sm:$0xf]
        %v517 = vld [vmem:[%s310 + $0x38] sm:$0xf]
        %v518 = vld [vmem:[%s310 + $0x3c] sm:$0xf]
        %v519 = vld [vmem:[%s310 + $0x40] sm:$0xf]
        %v520 = vld [vmem:[%s310 + $0x44] sm:$0xf]
        %v521 = vld [vmem:[%s310 + $0x48] sm:$0xf]
        %v522 = vld [vmem:[%s310 + $0x4c] sm:$0xf]
        %v523 = vld [vmem:[%s310 + $0x50] sm:$0xf]
        %v524 = vld [vmem:[%s310 + $0x54] sm:$0xf]
        %v525 = vld [vmem:[%s310 + $0x58] sm:$0xf]
        %v526 = vld [vmem:[%s310 + $0x5c] sm:$0xf]
        %v527 = vld [vmem:[%s310 + $0x60] sm:$0xf]
        %v528 = vld [vmem:[%s310 + $0x64] sm:$0xf]
        %v529 = vld [vmem:[%s310 + $0x68] sm:$0xf]
        %v530 = vld [vmem:[%s310 + $0x6c] sm:$0xf]
        %v531 = vld [vmem:[%s310 + $0x70] sm:$0xf]
        %v532 = vld [vmem:[%s310 + $0x74] sm:$0xf]
        %v533 = vld [vmem:[%s310 + $0x78] sm:$0xf]
        %v534 = vld [vmem:[%s310 + $0x7c] sm:$0xf]
        %v567 = vunpack.c.l.b16 %v439
        %v568 = vunpack.c.h.b16 %v439
        %v569 = vunpack.c.l.b16 %v440
        %v570 = vunpack.c.h.b16 %v440
        %v571 = vunpack.c.l.b16 %v441
        %v572 = vunpack.c.h.b16 %v441
        %v573 = vunpack.c.l.b16 %v442
        %v574 = vunpack.c.h.b16 %v442
        %v575 = vunpack.c.l.b16 %v443
        %v576 = vunpack.c.h.b16 %v443
        %v577 = vunpack.c.l.b16 %v444
        %v578 = vunpack.c.h.b16 %v444
        %v579 = vunpack.c.l.b16 %v445
        %v580 = vunpack.c.h.b16 %v445
        %v581 = vunpack.c.l.b16 %v446
        %v582 = vunpack.c.h.b16 %v446
        %v583 = vunpack.c.l.b16 %v447
        %v584 = vunpack.c.h.b16 %v447
        %v585 = vunpack.c.l.b16 %v448
        %v586 = vunpack.c.h.b16 %v448
        %v587 = vunpack.c.l.b16 %v449
        %v588 = vunpack.c.h.b16 %v449
        %v589 = vunpack.c.l.b16 %v450
        %v590 = vunpack.c.h.b16 %v450
        %v591 = vunpack.c.l.b16 %v451
        %v592 = vunpack.c.h.b16 %v451
        %v593 = vunpack.c.l.b16 %v452
        %v594 = vunpack.c.h.b16 %v452
        %v595 = vunpack.c.l.b16 %v453
        %v596 = vunpack.c.h.b16 %v453
        %v597 = vunpack.c.l.b16 %v454
        %v598 = vunpack.c.h.b16 %v454
        %v599 = vunpack.c.l.b16 %v455
        %v600 = vunpack.c.h.b16 %v455
        %v601 = vunpack.c.l.b16 %v456
        %v602 = vunpack.c.h.b16 %v456
        %v603 = vunpack.c.l.b16 %v457
        %v604 = vunpack.c.h.b16 %v457
        %v605 = vunpack.c.l.b16 %v458
        %v606 = vunpack.c.h.b16 %v458
        %v607 = vunpack.c.l.b16 %v459
        %v608 = vunpack.c.h.b16 %v459
        %v609 = vunpack.c.l.b16 %v460
        %v610 = vunpack.c.h.b16 %v460
        %v611 = vunpack.c.l.b16 %v461
        %v612 = vunpack.c.h.b16 %v461
        %v613 = vunpack.c.l.b16 %v462
        %v614 = vunpack.c.h.b16 %v462
        %v615 = vunpack.c.l.b16 %v463
        %v616 = vunpack.c.h.b16 %v463
        %v617 = vunpack.c.l.b16 %v464
        %v618 = vunpack.c.h.b16 %v464
        %v619 = vunpack.c.l.b16 %v465
        %v620 = vunpack.c.h.b16 %v465
        %v621 = vunpack.c.l.b16 %v466
        %v622 = vunpack.c.h.b16 %v466
        %v623 = vunpack.c.l.b16 %v467
        %v624 = vunpack.c.h.b16 %v467
        %v625 = vunpack.c.l.b16 %v468
        %v626 = vunpack.c.h.b16 %v468
        %v627 = vunpack.c.l.b16 %v469
        %v628 = vunpack.c.h.b16 %v469
        %v629 = vunpack.c.l.b16 %v470
        %v630 = vunpack.c.h.b16 %v470
        %v631 = vpack.c.b16 %v569, %v567
        %v632 = vpack.c.b16 %v570, %v568
        %v633 = vpack.c.b16 %v573, %v571
        %v634 = vpack.c.b16 %v574, %v572
        %v635 = vpack.c.b16 %v577, %v575
        %v636 = vpack.c.b16 %v578, %v576
        %v637 = vpack.c.b16 %v581, %v579
        %v638 = vpack.c.b16 %v582, %v580
        %v639 = vpack.c.b16 %v585, %v583
        %v640 = vpack.c.b16 %v586, %v584
        %v641 = vpack.c.b16 %v589, %v587
        %v642 = vpack.c.b16 %v590, %v588
        %v643 = vpack.c.b16 %v593, %v591
        %v644 = vpack.c.b16 %v594, %v592
        %v645 = vpack.c.b16 %v597, %v595
        %v646 = vpack.c.b16 %v598, %v596
        %v647 = vpack.c.b16 %v601, %v599
        %v648 = vpack.c.b16 %v602, %v600
        %v649 = vpack.c.b16 %v605, %v603
        %v650 = vpack.c.b16 %v606, %v604
        %v651 = vpack.c.b16 %v609, %v607
        %v652 = vpack.c.b16 %v610, %v608
        %v653 = vpack.c.b16 %v613, %v611
        %v654 = vpack.c.b16 %v614, %v612
        %v655 = vpack.c.b16 %v617, %v615
        %v656 = vpack.c.b16 %v618, %v616
        %v657 = vpack.c.b16 %v621, %v619
        %v658 = vpack.c.b16 %v622, %v620
        %v659 = vpack.c.b16 %v625, %v623
        %v660 = vpack.c.b16 %v626, %v624
        %v661 = vpack.c.b16 %v629, %v627
        %v662 = vpack.c.b16 %v630, %v628
        %v727 = vunpack.c.l.b16 %v503
        %v728 = vunpack.c.l.b16 %v504
        %v729 = vunpack.c.l.b16 %v505
        %v730 = vunpack.c.l.b16 %v506
        %v731 = vunpack.c.l.b16 %v507
        %v732 = vunpack.c.l.b16 %v508
        %v733 = vunpack.c.l.b16 %v509
        %v734 = vunpack.c.l.b16 %v510
        %v735 = vunpack.c.l.b16 %v511
        %v736 = vunpack.c.l.b16 %v512
        %v737 = vunpack.c.l.b16 %v513
        %v738 = vunpack.c.l.b16 %v514
        %v739 = vunpack.c.l.b16 %v515
        %v740 = vunpack.c.l.b16 %v516
        %v741 = vunpack.c.l.b16 %v517
        %v742 = vunpack.c.l.b16 %v518
        %v743 = vunpack.c.l.b16 %v519
        %v744 = vunpack.c.l.b16 %v520
        %v745 = vunpack.c.l.b16 %v521
        %v746 = vunpack.c.l.b16 %v522
        %v747 = vunpack.c.l.b16 %v523
        %v748 = vunpack.c.l.b16 %v524
        %v749 = vunpack.c.l.b16 %v525
        %v750 = vunpack.c.l.b16 %v526
        %v751 = vunpack.c.l.b16 %v527
        %v752 = vunpack.c.l.b16 %v528
        %v753 = vunpack.c.l.b16 %v529
        %v754 = vunpack.c.l.b16 %v530
        %v755 = vunpack.c.l.b16 %v531
        %v756 = vunpack.c.l.b16 %v532
        %v757 = vunpack.c.l.b16 %v533
        %v758 = vunpack.c.l.b16 %v534
        %v759 = vpack.c.b16 %v728, %v727
        %v760 = vpack.c.b16 %v730, %v729
        %v761 = vpack.c.b16 %v732, %v731
        %v762 = vpack.c.b16 %v734, %v733
        %v763 = vpack.c.b16 %v736, %v735
        %v764 = vpack.c.b16 %v738, %v737
        %v765 = vpack.c.b16 %v740, %v739
        %v766 = vpack.c.b16 %v742, %v741
        %v767 = vpack.c.b16 %v744, %v743
        %v768 = vpack.c.b16 %v746, %v745
        %v769 = vpack.c.b16 %v748, %v747
        %v770 = vpack.c.b16 %v750, %v749
        %v771 = vpack.c.b16 %v752, %v751
        %v772 = vpack.c.b16 %v754, %v753
        %v773 = vpack.c.b16 %v756, %v755
        %v774 = vpack.c.b16 %v758, %v757
        %791 = vmatprep.subr.bf16.mxu0 0
        %792 = vmatpush1.bf16.msra.mxu0 %v759
        %793 = vmatprep.subr.bf16.mxu0 0
        %794 = vmatpush1.bf16.msra.mxu0 %v760
        %795 = vmatprep.subr.bf16.mxu0 0
        %796 = vmatpush1.bf16.msra.mxu0 %v761
        %797 = vmatprep.subr.bf16.mxu0 0
        %798 = vmatpush1.bf16.msra.mxu0 %v762
        %799 = vmatprep.subr.bf16.mxu0 0
        %800 = vmatpush1.bf16.msra.mxu0 %v763
        %801 = vmatprep.subr.bf16.mxu0 0
        %802 = vmatpush1.bf16.msra.mxu0 %v764
        %803 = vmatprep.subr.bf16.mxu0 0
        %804 = vmatpush1.bf16.msra.mxu0 %v765
        %805 = vmatprep.subr.bf16.mxu0 0
        %806 = vmatpush1.bf16.msra.mxu0 %v766
        %807 = vmatprep.subr.bf16.mxu0 0
        %808 = vmatpush1.bf16.msra.mxu0 %v767
        %809 = vmatprep.subr.bf16.mxu0 0
        %810 = vmatpush1.bf16.msra.mxu0 %v768
        %811 = vmatprep.subr.bf16.mxu0 0
        %812 = vmatpush1.bf16.msra.mxu0 %v769
        %813 = vmatprep.subr.bf16.mxu0 0
        %814 = vmatpush1.bf16.msra.mxu0 %v770
        %815 = vmatprep.subr.bf16.mxu0 0
        %816 = vmatpush1.bf16.msra.mxu0 %v771
        %817 = vmatprep.subr.bf16.mxu0 0
        %818 = vmatpush1.bf16.msra.mxu0 %v772
        %819 = vmatprep.subr.bf16.mxu0 0
        %820 = vmatpush1.bf16.msra.mxu0 %v773
        %821 = vmatprep.subr.bf16.mxu0 0
        %822 = vmatpush1.bf16.msra.mxu0 %v774
        %823 = vmatprep.mubr.bf16.mxu0 %v632
        %824 = vmatmul.mubr.bf16.gmra.mrb[0].mxu0 %v631
        %v825 = vpop.f32.mrb[0].mxu0
        %v826 = vadd.f32 0.0, %v825
        %v827 = vpop.f32.mrb[0].mxu0
        %v828 = vpop.f32.mrb[0].mxu0
        %v829 = vadd.f32 0.0, %v828
        %v830 = vpop.f32.mrb[0].mxu0
        %831 = vmatprep.mubr.bf16.mxu0 %v634
        %832 = vmatmul.mubr.bf16.gmra.mrb[0].mxu0 %v633
        %v833 = vpop.f32.mrb[0].mxu0
        %v834 = vadd.f32 0.0, %v833
        %v835 = vpop.f32.mrb[0].mxu0
        %v836 = vpop.f32.mrb[0].mxu0
        %v837 = vadd.f32 0.0, %v836
        %v838 = vpop.f32.mrb[0].mxu0
        %839 = vmatprep.mubr.bf16.mxu0 %v636
        %840 = vmatmul.mubr.bf16.gmra.mrb[0].mxu0 %v635
        %v841 = vpop.f32.mrb[0].mxu0
        %v842 = vadd.f32 0.0, %v841
        %v843 = vpop.f32.mrb[0].mxu0
        %v844 = vpop.f32.mrb[0].mxu0
        %v845 = vadd.f32 0.0, %v844
        %v846 = vpop.f32.mrb[0].mxu0
        %847 = vmatprep.mubr.bf16.mxu0 %v638
        %848 = vmatmul.mubr.bf16.gmra.mrb[0].mxu0 %v637
        %v849 = vpop.f32.mrb[0].mxu0
        %v850 = vadd.f32 0.0, %v849
        %v851 = vpop.f32.mrb[0].mxu0
        %v852 = vpop.f32.mrb[0].mxu0
        %v853 = vadd.f32 0.0, %v852
        %v854 = vpop.f32.mrb[0].mxu0
        %855 = vmatprep.mubr.bf16.mxu0 %v640
        %856 = vmatmul.mubr.bf16.gmra.mrb[0].mxu0 %v639
        %v857 = vpop.f32.mrb[0].mxu0
        %v858 = vadd.f32 0.0, %v857
        %v859 = vpop.f32.mrb[0].mxu0
        %v860 = vpop.f32.mrb[0].mxu0
        %v861 = vadd.f32 0.0, %v860
        %v862 = vpop.f32.mrb[0].mxu0
        %863 = vmatprep.mubr.bf16.mxu0 %v642
        %864 = vmatmul.mubr.bf16.gmra.mrb[0].mxu0 %v641
        %v865 = vpop.f32.mrb[0].mxu0
        %v866 = vadd.f32 0.0, %v865
        %v867 = vpop.f32.mrb[0].mxu0
        %v868 = vpop.f32.mrb[0].mxu0
        %v869 = vadd.f32 0.0, %v868
        %v870 = vpop.f32.mrb[0].mxu0
        %871 = vmatprep.mubr.bf16.mxu0 %v644
        %872 = vmatmul.mubr.bf16.gmra.mrb[0].mxu0 %v643
        %v873 = vpop.f32.mrb[0].mxu0
        %v874 = vadd.f32 0.0, %v873
        %v875 = vpop.f32.mrb[0].mxu0
        %v876 = vpop.f32.mrb[0].mxu0
        %v877 = vadd.f32 0.0, %v876
        %v878 = vpop.f32.mrb[0].mxu0
        %879 = vmatprep.mubr.bf16.mxu0 %v646
        %880 = vmatmul.mubr.bf16.gmra.mrb[0].mxu0 %v645
        %v881 = vpop.f32.mrb[0].mxu0
        %v882 = vadd.f32 0.0, %v881
        %v883 = vpop.f32.mrb[0].mxu0
        %v884 = vpop.f32.mrb[0].mxu0
        %v885 = vadd.f32 0.0, %v884
        %v886 = vpop.f32.mrb[0].mxu0
        %887 = vmatprep.mubr.bf16.mxu0 %v648
        %888 = vmatmul.mubr.bf16.gmra.mrb[0].mxu0 %v647
        %v889 = vpop.f32.mrb[0].mxu0
        %v890 = vadd.f32 0.0, %v889
        %v891 = vpop.f32.mrb[0].mxu0
        %v892 = vpop.f32.mrb[0].mxu0
        %v893 = vadd.f32 0.0, %v892
        %v894 = vpop.f32.mrb[0].mxu0
        %895 = vmatprep.mubr.bf16.mxu0 %v650
        %896 = vmatmul.mubr.bf16.gmra.mrb[0].mxu0 %v649
        %v897 = vpop.f32.mrb[0].mxu0
        %v898 = vadd.f32 0.0, %v897
        %v899 = vpop.f32.mrb[0].mxu0
        %v900 = vpop.f32.mrb[0].mxu0
        %v901 = vadd.f32 0.0, %v900
        %v902 = vpop.f32.mrb[0].mxu0
        %903 = vmatprep.mubr.bf16.mxu0 %v652
        %904 = vmatmul.mubr.bf16.gmra.mrb[0].mxu0 %v651
        %v905 = vpop.f32.mrb[0].mxu0
        %v906 = vadd.f32 0.0, %v905
        %v907 = vpop.f32.mrb[0].mxu0
        %v908 = vpop.f32.mrb[0].mxu0
        %v909 = vadd.f32 0.0, %v908
        %v910 = vpop.f32.mrb[0].mxu0
        %911 = vmatprep.mubr.bf16.mxu0 %v654
        %912 = vmatmul.mubr.bf16.gmra.mrb[0].mxu0 %v653
        %v913 = vpop.f32.mrb[0].mxu0
        %v914 = vadd.f32 0.0, %v913
        %v915 = vpop.f32.mrb[0].mxu0
        %v916 = vpop.f32.mrb[0].mxu0
        %v917 = vadd.f32 0.0, %v916
        %v918 = vpop.f32.mrb[0].mxu0
        %919 = vmatprep.mubr.bf16.mxu0 %v656
        %920 = vmatmul.mubr.bf16.gmra.mrb[0].mxu0 %v655
        %v921 = vpop.f32.mrb[0].mxu0
        %v922 = vadd.f32 0.0, %v921
        %v923 = vpop.f32.mrb[0].mxu0
        %v924 = vpop.f32.mrb[0].mxu0
        %v925 = vadd.f32 0.0, %v924
        %v926 = vpop.f32.mrb[0].mxu0
        %927 = vmatprep.mubr.bf16.mxu0 %v658
        %928 = vmatmul.mubr.bf16.gmra.mrb[0].mxu0 %v657
        %v929 = vpop.f32.mrb[0].mxu0
        %v930 = vadd.f32 0.0, %v929
        %v931 = vpop.f32.mrb[0].mxu0
        %v932 = vpop.f32.mrb[0].mxu0
        %v933 = vadd.f32 0.0, %v932
        %v934 = vpop.f32.mrb[0].mxu0
        %935 = vmatprep.mubr.bf16.mxu0 %v660
        %936 = vmatmul.mubr.bf16.gmra.mrb[0].mxu0 %v659
        %v937 = vpop.f32.mrb[0].mxu0
        %v938 = vadd.f32 0.0, %v937
        %v939 = vpop.f32.mrb[0].mxu0
        %v940 = vpop.f32.mrb[0].mxu0
        %v941 = vadd.f32 0.0, %v940
        %v942 = vpop.f32.mrb[0].mxu0
        %943 = vmatprep.mubr.bf16.mxu0 %v662
        %944 = vmatmul.mubr.bf16.gmra.mrb[0].mxu0 %v661
        %v945 = vpop.f32.mrb[0].mxu0
        %v946 = vadd.f32 0.0, %v945
        %v947 = vpop.f32.mrb[0].mxu0
        %v948 = vpop.f32.mrb[0].mxu0
        %v949 = vadd.f32 0.0, %v948
        %v950 = vpop.f32.mrb[0].mxu0
        %951 = vdwg.mxu0
        %v952 = vadd.f32 %v471, %v826
        %v953 = vadd.f32 %v472, %v829
        %v954 = vadd.f32 %v473, %v834
        %v955 = vadd.f32 %v474, %v837
        %v956 = vadd.f32 %v475, %v842
        %v957 = vadd.f32 %v476, %v845
        %v958 = vadd.f32 %v477, %v850
        %v959 = vadd.f32 %v478, %v853
        %v960 = vadd.f32 %v479, %v858
        %v961 = vadd.f32 %v480, %v861
        %v962 = vadd.f32 %v481, %v866
        %v963 = vadd.f32 %v482, %v869
        %v964 = vadd.f32 %v483, %v874
        %v965 = vadd.f32 %v484, %v877
        %v966 = vadd.f32 %v485, %v882
        %v967 = vadd.f32 %v486, %v885
        %v968 = vadd.f32 %v487, %v890
        %v969 = vadd.f32 %v488, %v893
        %v970 = vadd.f32 %v489, %v898
        %v971 = vadd.f32 %v490, %v901
        %v972 = vadd.f32 %v491, %v906
        %v973 = vadd.f32 %v492, %v909
        %v974 = vadd.f32 %v493, %v914
        %v975 = vadd.f32 %v494, %v917
        %v976 = vadd.f32 %v495, %v922
        %v977 = vadd.f32 %v496, %v925
        %v978 = vadd.f32 %v497, %v930
        %v979 = vadd.f32 %v498, %v933
        %v980 = vadd.f32 %v499, %v938
        %v981 = vadd.f32 %v500, %v941
        %v982 = vadd.f32 %v501, %v946
        %v983 = vadd.f32 %v502, %v949
        %984 = vst [vmem:[#allocation2] sm:$0xff] %v952
        %985 = vst [vmem:[#allocation2 + $0x8] sm:$0xff] %v953
        %986 = vst [vmem:[#allocation2 + $0x10] sm:$0xff] %v954
        %987 = vst [vmem:[#allocation2 + $0x18] sm:$0xff] %v955
        %988 = vst [vmem:[#allocation2 + $0x20] sm:$0xff] %v956
        %989 = vst [vmem:[#allocation2 + $0x28] sm:$0xff] %v957
        %990 = vst [vmem:[#allocation2 + $0x30] sm:$0xff] %v958
        %991 = vst [vmem:[#allocation2 + $0x38] sm:$0xff] %v959
        %992 = vst [vmem:[#allocation2 + $0x40] sm:$0xff] %v960
        %993 = vst [vmem:[#allocation2 + $0x48] sm:$0xff] %v961
        %994 = vst [vmem:[#allocation2 + $0x50] sm:$0xff] %v962
        %995 = vst [vmem:[#allocation2 + $0x58] sm:$0xff] %v963
        %996 = vst [vmem:[#allocation2 + $0x60] sm:$0xff] %v964
        %997 = vst [vmem:[#allocation2 + $0x68] sm:$0xff] %v965
        %998 = vst [vmem:[#allocation2 + $0x70] sm:$0xff] %v966
        %999 = vst [vmem:[#allocation2 + $0x78] sm:$0xff] %v967
        %1000 = vst [vmem:[#allocation2 + $0x80] sm:$0xff] %v968
        %1001 = vst [vmem:[#allocation2 + $0x88] sm:$0xff] %v969
        %1002 = vst [vmem:[#allocation2 + $0x90] sm:$0xff] %v970
        %1003 = vst [vmem:[#allocation2 + $0x98] sm:$0xff] %v971
        %1004 = vst [vmem:[#allocation2 + $0xa0] sm:$0xff] %v972
        %1005 = vst [vmem:[#allocation2 + $0xa8] sm:$0xff] %v973
        %1006 = vst [vmem:[#allocation2 + $0xb0] sm:$0xff] %v974
        %1007 = vst [vmem:[#allocation2 + $0xb8] sm:$0xff] %v975
        %1008 = vst [vmem:[#allocation2 + $0xc0] sm:$0xff] %v976
        %1009 = vst [vmem:[#allocation2 + $0xc8] sm:$0xff] %v977
        %1010 = vst [vmem:[#allocation2 + $0xd0] sm:$0xff] %v978
        %1011 = vst [vmem:[#allocation2 + $0xd8] sm:$0xff] %v979
        %1012 = vst [vmem:[#allocation2 + $0xe0] sm:$0xff] %v980
        %1013 = vst [vmem:[#allocation2 + $0xe8] sm:$0xff] %v981
        %1014 = vst [vmem:[#allocation2 + $0xf0] sm:$0xff] %v982
        %1015 = vst [vmem:[#allocation2 + $0xf8] sm:$0xff] %v983
        %v1016 = vld [vmem:[#allocation3] sm:$0xff]
        %v1017 = vld [vmem:[#allocation3 + $0x8] sm:$0xff]
        %v1018 = vld [vmem:[#allocation3 + $0x10] sm:$0xff]
        %v1019 = vld [vmem:[#allocation3 + $0x18] sm:$0xff]
        %v1020 = vld [vmem:[#allocation3 + $0x20] sm:$0xff]
        %v1021 = vld [vmem:[#allocation3 + $0x28] sm:$0xff]
        %v1022 = vld [vmem:[#allocation3 + $0x30] sm:$0xff]
        %v1023 = vld [vmem:[#allocation3 + $0x38] sm:$0xff]
        %v1024 = vld [vmem:[#allocation3 + $0x40] sm:$0xff]
        %v1025 = vld [vmem:[#allocation3 + $0x48] sm:$0xff]
        %v1026 = vld [vmem:[#allocation3 + $0x50] sm:$0xff]
        %v1027 = vld [vmem:[#allocation3 + $0x58] sm:$0xff]
        %v1028 = vld [vmem:[#allocation3 + $0x60] sm:$0xff]
        %v1029 = vld [vmem:[#allocation3 + $0x68] sm:$0xff]
        %v1030 = vld [vmem:[#allocation3 + $0x70] sm:$0xff]
        %v1031 = vld [vmem:[#allocation3 + $0x78] sm:$0xff]
        %v1032 = vld [vmem:[#allocation3 + $0x80] sm:$0xff]
        %v1033 = vld [vmem:[#allocation3 + $0x88] sm:$0xff]
        %v1034 = vld [vmem:[#allocation3 + $0x90] sm:$0xff]
        %v1035 = vld [vmem:[#allocation3 + $0x98] sm:$0xff]
        %v1036 = vld [vmem:[#allocation3 + $0xa0] sm:$0xff]
        %v1037 = vld [vmem:[#allocation3 + $0xa8] sm:$0xff]
        %v1038 = vld [vmem:[#allocation3 + $0xb0] sm:$0xff]
        %v1039 = vld [vmem:[#allocation3 + $0xb8] sm:$0xff]
        %v1040 = vld [vmem:[#allocation3 + $0xc0] sm:$0xff]
        %v1041 = vld [vmem:[#allocation3 + $0xc8] sm:$0xff]
        %v1042 = vld [vmem:[#allocation3 + $0xd0] sm:$0xff]
        %v1043 = vld [vmem:[#allocation3 + $0xd8] sm:$0xff]
        %v1044 = vld [vmem:[#allocation3 + $0xe0] sm:$0xff]
        %v1045 = vld [vmem:[#allocation3 + $0xe8] sm:$0xff]
        %v1046 = vld [vmem:[#allocation3 + $0xf0] sm:$0xff]
        %v1047 = vld [vmem:[#allocation3 + $0xf8] sm:$0xff]
        %v1048 = vunpack.c.l.bf16 %v439
        %v1049 = vunpack.c.h.bf16 %v439
        %v1050 = vunpack.c.l.bf16 %v440
        %v1051 = vunpack.c.h.bf16 %v440
        %v1052 = vunpack.c.l.bf16 %v441
        %v1053 = vunpack.c.h.bf16 %v441
        %v1054 = vunpack.c.l.bf16 %v442
        %v1055 = vunpack.c.h.bf16 %v442
        %v1056 = vunpack.c.l.bf16 %v443
        %v1057 = vunpack.c.h.bf16 %v443
        %v1058 = vunpack.c.l.bf16 %v444
        %v1059 = vunpack.c.h.bf16 %v444
        %v1060 = vunpack.c.l.bf16 %v445
        %v1061 = vunpack.c.h.bf16 %v445
        %v1062 = vunpack.c.l.bf16 %v446
        %v1063 = vunpack.c.h.bf16 %v446
        %v1064 = vunpack.c.l.bf16 %v447
        %v1065 = vunpack.c.h.bf16 %v447
        %v1066 = vunpack.c.l.bf16 %v448
        %v1067 = vunpack.c.h.bf16 %v448
        %v1068 = vunpack.c.l.bf16 %v449
        %v1069 = vunpack.c.h.bf16 %v449
        %v1070 = vunpack.c.l.bf16 %v450
        %v1071 = vunpack.c.h.bf16 %v450
        %v1072 = vunpack.c.l.bf16 %v451
        %v1073 = vunpack.c.h.bf16 %v451
        %v1074 = vunpack.c.l.bf16 %v452
        %v1075 = vunpack.c.h.bf16 %v452
        %v1076 = vunpack.c.l.bf16 %v453
        %v1077 = vunpack.c.h.bf16 %v453
        %v1078 = vunpack.c.l.bf16 %v454
        %v1079 = vunpack.c.h.bf16 %v454
        %v1080 = vunpack.c.l.bf16 %v455
        %v1081 = vunpack.c.h.bf16 %v455
        %v1082 = vunpack.c.l.bf16 %v456
        %v1083 = vunpack.c.h.bf16 %v456
        %v1084 = vunpack.c.l.bf16 %v457
        %v1085 = vunpack.c.h.bf16 %v457
        %v1086 = vunpack.c.l.bf16 %v458
        %v1087 = vunpack.c.h.bf16 %v458
        %v1088 = vunpack.c.l.bf16 %v459
        %v1089 = vunpack.c.h.bf16 %v459
        %v1090 = vunpack.c.l.bf16 %v460
        %v1091 = vunpack.c.h.bf16 %v460
        %v1092 = vunpack.c.l.bf16 %v461
        %v1093 = vunpack.c.h.bf16 %v461
        %v1094 = vunpack.c.l.bf16 %v462
        %v1095 = vunpack.c.h.bf16 %v462
        %v1096 = vunpack.c.l.bf16 %v463
        %v1097 = vunpack.c.h.bf16 %v463
        %v1098 = vunpack.c.l.bf16 %v464
        %v1099 = vunpack.c.h.bf16 %v464
        %v1100 = vunpack.c.l.bf16 %v465
        %v1101 = vunpack.c.h.bf16 %v465
        %v1102 = vunpack.c.l.bf16 %v466
        %v1103 = vunpack.c.h.bf16 %v466
        %v1104 = vunpack.c.l.bf16 %v467
        %v1105 = vunpack.c.h.bf16 %v467
        %v1106 = vunpack.c.l.bf16 %v468
        %v1107 = vunpack.c.h.bf16 %v468
        %v1108 = vunpack.c.l.bf16 %v469
        %v1109 = vunpack.c.h.bf16 %v469
        %v1110 = vunpack.c.l.bf16 %v470
        %v1111 = vunpack.c.h.bf16 %v470
        %v1112 = vadd.f32 %v1048, %v1049
        %1113 = vadd.xlane.f32.xlu0 %v1112
        %v1114 = vpop.xlane.xlu0 %1113
        %v1115 = vadd.f32 %v1050, %v1051
        %1116 = vadd.xlane.f32.xlu0 %v1115
        %v1117 = vpop.xlane.xlu0 %1116
        %v1118 = vadd.f32 %v1052, %v1053
        %1119 = vadd.xlane.f32.xlu0 %v1118
        %v1120 = vpop.xlane.xlu0 %1119
        %v1121 = vadd.f32 %v1054, %v1055
        %1122 = vadd.xlane.f32.xlu0 %v1121
        %v1123 = vpop.xlane.xlu0 %1122
        %v1124 = vadd.f32 %v1056, %v1057
        %1125 = vadd.xlane.f32.xlu0 %v1124
        %v1126 = vpop.xlane.xlu0 %1125
        %v1127 = vadd.f32 %v1058, %v1059
        %1128 = vadd.xlane.f32.xlu0 %v1127
        %v1129 = vpop.xlane.xlu0 %1128
        %v1130 = vadd.f32 %v1060, %v1061
        %1131 = vadd.xlane.f32.xlu0 %v1130
        %v1132 = vpop.xlane.xlu0 %1131
        %v1133 = vadd.f32 %v1062, %v1063
        %1134 = vadd.xlane.f32.xlu0 %v1133
        %v1135 = vpop.xlane.xlu0 %1134
        %v1136 = vadd.f32 %v1064, %v1065
        %1137 = vadd.xlane.f32.xlu0 %v1136
        %v1138 = vpop.xlane.xlu0 %1137
        %v1139 = vadd.f32 %v1066, %v1067
        %1140 = vadd.xlane.f32.xlu0 %v1139
        %v1141 = vpop.xlane.xlu0 %1140
        %v1142 = vadd.f32 %v1068, %v1069
        %1143 = vadd.xlane.f32.xlu0 %v1142
        %v1144 = vpop.xlane.xlu0 %1143
        %v1145 = vadd.f32 %v1070, %v1071
        %1146 = vadd.xlane.f32.xlu0 %v1145
        %v1147 = vpop.xlane.xlu0 %1146
        %v1148 = vadd.f32 %v1072, %v1073
        %1149 = vadd.xlane.f32.xlu0 %v1148
        %v1150 = vpop.xlane.xlu0 %1149
        %v1151 = vadd.f32 %v1074, %v1075
        %1152 = vadd.xlane.f32.xlu0 %v1151
        %v1153 = vpop.xlane.xlu0 %1152
        %v1154 = vadd.f32 %v1076, %v1077
        %1155 = vadd.xlane.f32.xlu0 %v1154
        %v1156 = vpop.xlane.xlu0 %1155
        %v1157 = vadd.f32 %v1078, %v1079
        %1158 = vadd.xlane.f32.xlu0 %v1157
        %v1159 = vpop.xlane.xlu0 %1158
        %v1160 = vadd.f32 %v1080, %v1081
        %1161 = vadd.xlane.f32.xlu0 %v1160
        %v1162 = vpop.xlane.xlu0 %1161
        %v1163 = vadd.f32 %v1082, %v1083
        %1164 = vadd.xlane.f32.xlu0 %v1163
        %v1165 = vpop.xlane.xlu0 %1164
        %v1166 = vadd.f32 %v1084, %v1085
        %1167 = vadd.xlane.f32.xlu0 %v1166
        %v1168 = vpop.xlane.xlu0 %1167
        %v1169 = vadd.f32 %v1086, %v1087
        %1170 = vadd.xlane.f32.xlu0 %v1169
        %v1171 = vpop.xlane.xlu0 %1170
        %v1172 = vadd.f32 %v1088, %v1089
        %1173 = vadd.xlane.f32.xlu0 %v1172
        %v1174 = vpop.xlane.xlu0 %1173
        %v1175 = vadd.f32 %v1090, %v1091
        %1176 = vadd.xlane.f32.xlu0 %v1175
        %v1177 = vpop.xlane.xlu0 %1176
        %v1178 = vadd.f32 %v1092, %v1093
        %1179 = vadd.xlane.f32.xlu0 %v1178
        %v1180 = vpop.xlane.xlu0 %1179
        %v1181 = vadd.f32 %v1094, %v1095
        %1182 = vadd.xlane.f32.xlu0 %v1181
        %v1183 = vpop.xlane.xlu0 %1182
        %v1184 = vadd.f32 %v1096, %v1097
        %1185 = vadd.xlane.f32.xlu0 %v1184
        %v1186 = vpop.xlane.xlu0 %1185
        %v1187 = vadd.f32 %v1098, %v1099
        %1188 = vadd.xlane.f32.xlu0 %v1187
        %v1189 = vpop.xlane.xlu0 %1188
        %v1190 = vadd.f32 %v1100, %v1101
        %1191 = vadd.xlane.f32.xlu0 %v1190
        %v1192 = vpop.xlane.xlu0 %1191
        %v1193 = vadd.f32 %v1102, %v1103
        %1194 = vadd.xlane.f32.xlu0 %v1193
        %v1195 = vpop.xlane.xlu0 %1194
        %v1196 = vadd.f32 %v1104, %v1105
        %1197 = vadd.xlane.f32.xlu0 %v1196
        %v1198 = vpop.xlane.xlu0 %1197
        %v1199 = vadd.f32 %v1106, %v1107
        %1200 = vadd.xlane.f32.xlu0 %v1199
        %v1201 = vpop.xlane.xlu0 %1200
        %v1202 = vadd.f32 %v1108, %v1109
        %1203 = vadd.xlane.f32.xlu0 %v1202
        %v1204 = vpop.xlane.xlu0 %1203
        %v1205 = vadd.f32 %v1110, %v1111
        %1206 = vadd.xlane.f32.xlu0 %v1205
        %v1207 = vpop.xlane.xlu0 %1206
        %v1208 = vadd.f32 %v1016, %v1114
        %v1209 = vadd.f32 %v1017, %v1117
        %v1210 = vadd.f32 %v1018, %v1120
        %v1211 = vadd.f32 %v1019, %v1123
        %v1212 = vadd.f32 %v1020, %v1126
        %v1213 = vadd.f32 %v1021, %v1129
        %v1214 = vadd.f32 %v1022, %v1132
        %v1215 = vadd.f32 %v1023, %v1135
        %v1216 = vadd.f32 %v1024, %v1138
        %v1217 = vadd.f32 %v1025, %v1141
        %v1218 = vadd.f32 %v1026, %v1144
        %v1219 = vadd.f32 %v1027, %v1147
        %v1220 = vadd.f32 %v1028, %v1150
        %v1221 = vadd.f32 %v1029, %v1153
        %v1222 = vadd.f32 %v1030, %v1156
        %v1223 = vadd.f32 %v1031, %v1159
        %v1224 = vadd.f32 %v1032, %v1162
        %v1225 = vadd.f32 %v1033, %v1165
        %v1226 = vadd.f32 %v1034, %v1168
        %v1227 = vadd.f32 %v1035, %v1171
        %v1228 = vadd.f32 %v1036, %v1174
        %v1229 = vadd.f32 %v1037, %v1177
        %v1230 = vadd.f32 %v1038, %v1180
        %v1231 = vadd.f32 %v1039, %v1183
        %v1232 = vadd.f32 %v1040, %v1186
        %v1233 = vadd.f32 %v1041, %v1189
        %v1234 = vadd.f32 %v1042, %v1192
        %v1235 = vadd.f32 %v1043, %v1195
        %v1236 = vadd.f32 %v1044, %v1198
        %v1237 = vadd.f32 %v1045, %v1201
        %v1238 = vadd.f32 %v1046, %v1204
        %v1239 = vadd.f32 %v1047, %v1207
        %vm1240 = vcmask 7168
        %1241 = vst.msk [vmem:[#allocation3] sm:$0xff] %vm1240, %v1208
        %1242 = vst.msk [vmem:[#allocation3 + $0x8] sm:$0xff] %vm1240, %v1209
        %1243 = vst.msk [vmem:[#allocation3 + $0x10] sm:$0xff] %vm1240, %v1210
        %1244 = vst.msk [vmem:[#allocation3 + $0x18] sm:$0xff] %vm1240, %v1211
        %1245 = vst.msk [vmem:[#allocation3 + $0x20] sm:$0xff] %vm1240, %v1212
        %1246 = vst.msk [vmem:[#allocation3 + $0x28] sm:$0xff] %vm1240, %v1213
        %1247 = vst.msk [vmem:[#allocation3 + $0x30] sm:$0xff] %vm1240, %v1214
        %1248 = vst.msk [vmem:[#allocation3 + $0x38] sm:$0xff] %vm1240, %v1215
        %1249 = vst.msk [vmem:[#allocation3 + $0x40] sm:$0xff] %vm1240, %v1216
        %1250 = vst.msk [vmem:[#allocation3 + $0x48] sm:$0xff] %vm1240, %v1217
        %1251 = vst.msk [vmem:[#allocation3 + $0x50] sm:$0xff] %vm1240, %v1218
        %1252 = vst.msk [vmem:[#allocation3 + $0x58] sm:$0xff] %vm1240, %v1219
        %1253 = vst.msk [vmem:[#allocation3 + $0x60] sm:$0xff] %vm1240, %v1220
        %1254 = vst.msk [vmem:[#allocation3 + $0x68] sm:$0xff] %vm1240, %v1221
        %1255 = vst.msk [vmem:[#allocation3 + $0x70] sm:$0xff] %vm1240, %v1222
        %1256 = vst.msk [vmem:[#allocation3 + $0x78] sm:$0xff] %vm1240, %v1223
        %1257 = vst.msk [vmem:[#allocation3 + $0x80] sm:$0xff] %vm1240, %v1224
        %1258 = vst.msk [vmem:[#allocation3 + $0x88] sm:$0xff] %vm1240, %v1225
        %1259 = vst.msk [vmem:[#allocation3 + $0x90] sm:$0xff] %vm1240, %v1226
        %1260 = vst.msk [vmem:[#allocation3 + $0x98] sm:$0xff] %vm1240, %v1227
        %1261 = vst.msk [vmem:[#allocation3 + $0xa0] sm:$0xff] %vm1240, %v1228
        %1262 = vst.msk [vmem:[#allocation3 + $0xa8] sm:$0xff] %vm1240, %v1229
        %1263 = vst.msk [vmem:[#allocation3 + $0xb0] sm:$0xff] %vm1240, %v1230
        %1264 = vst.msk [vmem:[#allocation3 + $0xb8] sm:$0xff] %vm1240, %v1231
        %1265 = vst.msk [vmem:[#allocation3 + $0xc0] sm:$0xff] %vm1240, %v1232
        %1266 = vst.msk [vmem:[#allocation3 + $0xc8] sm:$0xff] %vm1240, %v1233
        %1267 = vst.msk [vmem:[#allocation3 + $0xd0] sm:$0xff] %vm1240, %v1234
        %1268 = vst.msk [vmem:[#allocation3 + $0xd8] sm:$0xff] %vm1240, %v1235
        %1269 = vst.msk [vmem:[#allocation3 + $0xe0] sm:$0xff] %vm1240, %v1236
        %1270 = vst.msk [vmem:[#allocation3 + $0xe8] sm:$0xff] %vm1240, %v1237
        %1271 = vst.msk [vmem:[#allocation3 + $0xf0] sm:$0xff] %vm1240, %v1238
        %1272 = vst.msk [vmem:[#allocation3 + $0xf8] sm:$0xff] %vm1240, %v1239
        %p1273 = scmp.eq.s32.totalorder %s31, 2
        // Predicated region
        $region65: #{tpu_custom_call.1} parent=39 // pred_check
          %p1274 = pneg %p1273
        $region66: #{tpu_custom_call.1} parent=39 // pred_check_branch
          %1276 = sbr.rel (%p1274) target = $region68
        $region67: #{tpu_custom_call.1} parent=39 // pred_region
          %v1277 = vld [vmem:[#allocation3] sm:$0xff]
          %v1278 = vld [vmem:[#allocation3 + $0x8] sm:$0xff]
          %v1279 = vld [vmem:[#allocation3 + $0x10] sm:$0xff]
          %v1280 = vld [vmem:[#allocation3 + $0x18] sm:$0xff]
          %v1281 = vld [vmem:[#allocation3 + $0x20] sm:$0xff]
          %v1282 = vld [vmem:[#allocation3 + $0x28] sm:$0xff]
          %v1283 = vld [vmem:[#allocation3 + $0x30] sm:$0xff]
          %v1284 = vld [vmem:[#allocation3 + $0x38] sm:$0xff]
          %v1285 = vld [vmem:[#allocation3 + $0x40] sm:$0xff]
          %v1286 = vld [vmem:[#allocation3 + $0x48] sm:$0xff]
          %v1287 = vld [vmem:[#allocation3 + $0x50] sm:$0xff]
          %v1288 = vld [vmem:[#allocation3 + $0x58] sm:$0xff]
          %v1289 = vld [vmem:[#allocation3 + $0x60] sm:$0xff]
          %v1290 = vld [vmem:[#allocation3 + $0x68] sm:$0xff]
          %v1291 = vld [vmem:[#allocation3 + $0x70] sm:$0xff]
          %v1292 = vld [vmem:[#allocation3 + $0x78] sm:$0xff]
          %v1293 = vld [vmem:[#allocation3 + $0x80] sm:$0xff]
          %v1294 = vld [vmem:[#allocation3 + $0x88] sm:$0xff]
          %v1295 = vld [vmem:[#allocation3 + $0x90] sm:$0xff]
          %v1296 = vld [vmem:[#allocation3 + $0x98] sm:$0xff]
          %v1297 = vld [vmem:[#allocation3 + $0xa0] sm:$0xff]
          %v1298 = vld [vmem:[#allocation3 + $0xa8] sm:$0xff]
          %v1299 = vld [vmem:[#allocation3 + $0xb0] sm:$0xff]
          %v1300 = vld [vmem:[#allocation3 + $0xb8] sm:$0xff]
          %v1301 = vld [vmem:[#allocation3 + $0xc0] sm:$0xff]
          %v1302 = vld [vmem:[#allocation3 + $0xc8] sm:$0xff]
          %v1303 = vld [vmem:[#allocation3 + $0xd0] sm:$0xff]
          %v1304 = vld [vmem:[#allocation3 + $0xd8] sm:$0xff]
          %v1305 = vld [vmem:[#allocation3 + $0xe0] sm:$0xff]
          %v1306 = vld [vmem:[#allocation3 + $0xe8] sm:$0xff]
          %v1307 = vld [vmem:[#allocation3 + $0xf0] sm:$0xff]
          %v1308 = vld [vmem:[#allocation3 + $0xf8] sm:$0xff]
          %v1309 = vmax.f32 %v1277, 1.0
          %v1310 = vmax.f32 %v1278, 1.0
          %v1311 = vmax.f32 %v1279, 1.0
          %v1312 = vmax.f32 %v1280, 1.0
          %v1313 = vmax.f32 %v1281, 1.0
          %v1314 = vmax.f32 %v1282, 1.0
          %v1315 = vmax.f32 %v1283, 1.0
          %v1316 = vmax.f32 %v1284, 1.0
          %v1317 = vmax.f32 %v1285, 1.0
          %v1318 = vmax.f32 %v1286, 1.0
          %v1319 = vmax.f32 %v1287, 1.0
          %v1320 = vmax.f32 %v1288, 1.0
          %v1321 = vmax.f32 %v1289, 1.0
          %v1322 = vmax.f32 %v1290, 1.0
          %v1323 = vmax.f32 %v1291, 1.0
          %v1324 = vmax.f32 %v1292, 1.0
          %v1325 = vmax.f32 %v1293, 1.0
          %v1326 = vmax.f32 %v1294, 1.0
          %v1327 = vmax.f32 %v1295, 1.0
          %v1328 = vmax.f32 %v1296, 1.0
          %v1329 = vmax.f32 %v1297, 1.0
          %v1330 = vmax.f32 %v1298, 1.0
          %v1331 = vmax.f32 %v1299, 1.0
          %v1332 = vmax.f32 %v1300, 1.0
          %v1333 = vmax.f32 %v1301, 1.0
          %v1334 = vmax.f32 %v1302, 1.0
          %v1335 = vmax.f32 %v1303, 1.0
          %v1336 = vmax.f32 %v1304, 1.0
          %v1337 = vmax.f32 %v1305, 1.0
          %v1338 = vmax.f32 %v1306, 1.0
          %v1339 = vmax.f32 %v1307, 1.0
          %v1340 = vmax.f32 %v1308, 1.0
          %v1341 = vrcp.pop %v1309
          %v1342 = vrcp.pop %v1310
          %v1343 = vrcp.pop %v1311
          %v1344 = vrcp.pop %v1312
          %v1345 = vrcp.pop %v1313
          %v1346 = vrcp.pop %v1314
          %v1347 = vrcp.pop %v1315
          %v1348 = vrcp.pop %v1316
          %v1349 = vrcp.pop %v1317
          %v1350 = vrcp.pop %v1318
          %v1351 = vrcp.pop %v1319
          %v1352 = vrcp.pop %v1320
          %v1353 = vrcp.pop %v1321
          %v1354 = vrcp.pop %v1322
          %v1355 = vrcp.pop %v1323
          %v1356 = vrcp.pop %v1324
          %v1357 = vrcp.pop %v1325
          %v1358 = vrcp.pop %v1326
          %v1359 = vrcp.pop %v1327
          %v1360 = vrcp.pop %v1328
          %v1361 = vrcp.pop %v1329
          %v1362 = vrcp.pop %v1330
          %v1363 = vrcp.pop %v1331
          %v1364 = vrcp.pop %v1332
          %v1365 = vrcp.pop %v1333
          %v1366 = vrcp.pop %v1334
          %v1367 = vrcp.pop %v1335
          %v1368 = vrcp.pop %v1336
          %v1369 = vrcp.pop %v1337
          %v1370 = vrcp.pop %v1338
          %v1371 = vrcp.pop %v1339
          %v1372 = vrcp.pop %v1340
          %v1373 = vld [vmem:[#allocation2] sm:$0xff]
          %v1374 = vld [vmem:[#allocation2 + $0x8] sm:$0xff]
          %v1375 = vld [vmem:[#allocation2 + $0x10] sm:$0xff]
          %v1376 = vld [vmem:[#allocation2 + $0x18] sm:$0xff]
          %v1377 = vld [vmem:[#allocation2 + $0x20] sm:$0xff]
          %v1378 = vld [vmem:[#allocation2 + $0x28] sm:$0xff]
          %v1379 = vld [vmem:[#allocation2 + $0x30] sm:$0xff]
          %v1380 = vld [vmem:[#allocation2 + $0x38] sm:$0xff]
          %v1381 = vld [vmem:[#allocation2 + $0x40] sm:$0xff]
          %v1382 = vld [vmem:[#allocation2 + $0x48] sm:$0xff]
          %v1383 = vld [vmem:[#allocation2 + $0x50] sm:$0xff]
          %v1384 = vld [vmem:[#allocation2 + $0x58] sm:$0xff]
          %v1385 = vld [vmem:[#allocation2 + $0x60] sm:$0xff]
          %v1386 = vld [vmem:[#allocation2 + $0x68] sm:$0xff]
          %v1387 = vld [vmem:[#allocation2 + $0x70] sm:$0xff]
          %v1388 = vld [vmem:[#allocation2 + $0x78] sm:$0xff]
          %v1389 = vld [vmem:[#allocation2 + $0x80] sm:$0xff]
          %v1390 = vld [vmem:[#allocation2 + $0x88] sm:$0xff]
          %v1391 = vld [vmem:[#allocation2 + $0x90] sm:$0xff]
          %v1392 = vld [vmem:[#allocation2 + $0x98] sm:$0xff]
          %v1393 = vld [vmem:[#allocation2 + $0xa0] sm:$0xff]
          %v1394 = vld [vmem:[#allocation2 + $0xa8] sm:$0xff]
          %v1395 = vld [vmem:[#allocation2 + $0xb0] sm:$0xff]
          %v1396 = vld [vmem:[#allocation2 + $0xb8] sm:$0xff]
          %v1397 = vld [vmem:[#allocation2 + $0xc0] sm:$0xff]
          %v1398 = vld [vmem:[#allocation2 + $0xc8] sm:$0xff]
          %v1399 = vld [vmem:[#allocation2 + $0xd0] sm:$0xff]
          %v1400 = vld [vmem:[#allocation2 + $0xd8] sm:$0xff]
          %v1401 = vld [vmem:[#allocation2 + $0xe0] sm:$0xff]
          %v1402 = vld [vmem:[#allocation2 + $0xe8] sm:$0xff]
          %v1403 = vld [vmem:[#allocation2 + $0xf0] sm:$0xff]
          %v1404 = vld [vmem:[#allocation2 + $0xf8] sm:$0xff]
          %1406 = vset.pattern.permute.xlu0 0
          %1407 = vperm.xlu0 %1406, %v1341
          %v1408 = vpop.permute.xlu0 %1407
          %1411 = vset.pattern.permute.xlu0 0
          %1412 = vperm.xlu0 %1411, %v1342
          %v1413 = vpop.permute.xlu0 %1412
          %1416 = vset.pattern.permute.xlu0 0
          %1417 = vperm.xlu0 %1416, %v1343
          %v1418 = vpop.permute.xlu0 %1417
          %1421 = vset.pattern.permute.xlu0 0
          %1422 = vperm.xlu0 %1421, %v1344
          %v1423 = vpop.permute.xlu0 %1422
          %1426 = vset.pattern.permute.xlu0 0
          %1427 = vperm.xlu0 %1426, %v1345
          %v1428 = vpop.permute.xlu0 %1427
          %1431 = vset.pattern.permute.xlu0 0
          %1432 = vperm.xlu0 %1431, %v1346
          %v1433 = vpop.permute.xlu0 %1432
          %1436 = vset.pattern.permute.xlu0 0
          %1437 = vperm.xlu0 %1436, %v1347
          %v1438 = vpop.permute.xlu0 %1437
          %1441 = vset.pattern.permute.xlu0 0
          %1442 = vperm.xlu0 %1441, %v1348
          %v1443 = vpop.permute.xlu0 %1442
          %1446 = vset.pattern.permute.xlu0 0
          %1447 = vperm.xlu0 %1446, %v1349
          %v1448 = vpop.permute.xlu0 %1447
          %1451 = vset.pattern.permute.xlu0 0
          %1452 = vperm.xlu0 %1451, %v1350
          %v1453 = vpop.permute.xlu0 %1452
          %1456 = vset.pattern.permute.xlu0 0
          %1457 = vperm.xlu0 %1456, %v1351
          %v1458 = vpop.permute.xlu0 %1457
          %1461 = vset.pattern.permute.xlu0 0
          %1462 = vperm.xlu0 %1461, %v1352
          %v1463 = vpop.permute.xlu0 %1462
          %1466 = vset.pattern.permute.xlu0 0
          %1467 = vperm.xlu0 %1466, %v1353
          %v1468 = vpop.permute.xlu0 %1467
          %1471 = vset.pattern.permute.xlu0 0
          %1472 = vperm.xlu0 %1471, %v1354
          %v1473 = vpop.permute.xlu0 %1472
          %1476 = vset.pattern.permute.xlu0 0
          %1477 = vperm.xlu0 %1476, %v1355
          %v1478 = vpop.permute.xlu0 %1477
          %1481 = vset.pattern.permute.xlu0 0
          %1482 = vperm.xlu0 %1481, %v1356
          %v1483 = vpop.permute.xlu0 %1482
          %1486 = vset.pattern.permute.xlu0 0
          %1487 = vperm.xlu0 %1486, %v1357
          %v1488 = vpop.permute.xlu0 %1487
          %1491 = vset.pattern.permute.xlu0 0
          %1492 = vperm.xlu0 %1491, %v1358
          %v1493 = vpop.permute.xlu0 %1492
          %1496 = vset.pattern.permute.xlu0 0
          %1497 = vperm.xlu0 %1496, %v1359
          %v1498 = vpop.permute.xlu0 %1497
          %1501 = vset.pattern.permute.xlu0 0
          %1502 = vperm.xlu0 %1501, %v1360
          %v1503 = vpop.permute.xlu0 %1502
          %1506 = vset.pattern.permute.xlu0 0
          %1507 = vperm.xlu0 %1506, %v1361
          %v1508 = vpop.permute.xlu0 %1507
          %1511 = vset.pattern.permute.xlu0 0
          %1512 = vperm.xlu0 %1511, %v1362
          %v1513 = vpop.permute.xlu0 %1512
          %1516 = vset.pattern.permute.xlu0 0
          %1517 = vperm.xlu0 %1516, %v1363
          %v1518 = vpop.permute.xlu0 %1517
          %1521 = vset.pattern.permute.xlu0 0
          %1522 = vperm.xlu0 %1521, %v1364
          %v1523 = vpop.permute.xlu0 %1522
          %1526 = vset.pattern.permute.xlu0 0
          %1527 = vperm.xlu0 %1526, %v1365
          %v1528 = vpop.permute.xlu0 %1527
          %1531 = vset.pattern.permute.xlu0 0
          %1532 = vperm.xlu0 %1531, %v1366
          %v1533 = vpop.permute.xlu0 %1532
          %1536 = vset.pattern.permute.xlu0 0
          %1537 = vperm.xlu0 %1536, %v1367
          %v1538 = vpop.permute.xlu0 %1537
          %1541 = vset.pattern.permute.xlu0 0
          %1542 = vperm.xlu0 %1541, %v1368
          %v1543 = vpop.permute.xlu0 %1542
          %1546 = vset.pattern.permute.xlu0 0
          %1547 = vperm.xlu0 %1546, %v1369
          %v1548 = vpop.permute.xlu0 %1547
          %1551 = vset.pattern.permute.xlu0 0
          %1552 = vperm.xlu0 %1551, %v1370
          %v1553 = vpop.permute.xlu0 %1552
          %1556 = vset.pattern.permute.xlu0 0
          %1557 = vperm.xlu0 %1556, %v1371
          %v1558 = vpop.permute.xlu0 %1557
          %1561 = vset.pattern.permute.xlu0 0
          %1562 = vperm.xlu0 %1561, %v1372
          %v1563 = vpop.permute.xlu0 %1562
          %v1565 = vmul.f32 %v1373, %v1408
          %v1566 = vmul.f32 %v1374, %v1413
          %v1567 = vmul.f32 %v1375, %v1418
          %v1568 = vmul.f32 %v1376, %v1423
          %v1569 = vmul.f32 %v1377, %v1428
          %v1570 = vmul.f32 %v1378, %v1433
          %v1571 = vmul.f32 %v1379, %v1438
          %v1572 = vmul.f32 %v1380, %v1443
          %v1573 = vmul.f32 %v1381, %v1448
          %v1574 = vmul.f32 %v1382, %v1453
          %v1575 = vmul.f32 %v1383, %v1458
          %v1576 = vmul.f32 %v1384, %v1463
          %v1577 = vmul.f32 %v1385, %v1468
          %v1578 = vmul.f32 %v1386, %v1473
          %v1579 = vmul.f32 %v1387, %v1478
          %v1580 = vmul.f32 %v1388, %v1483
          %v1581 = vmul.f32 %v1389, %v1488
          %v1582 = vmul.f32 %v1390, %v1493
          %v1583 = vmul.f32 %v1391, %v1498
          %v1584 = vmul.f32 %v1392, %v1503
          %v1585 = vmul.f32 %v1393, %v1508
          %v1586 = vmul.f32 %v1394, %v1513
          %v1587 = vmul.f32 %v1395, %v1518
          %v1588 = vmul.f32 %v1396, %v1523
          %v1589 = vmul.f32 %v1397, %v1528
          %v1590 = vmul.f32 %v1398, %v1533
          %v1591 = vmul.f32 %v1399, %v1538
          %v1592 = vmul.f32 %v1400, %v1543
          %v1593 = vmul.f32 %v1401, %v1548
          %v1594 = vmul.f32 %v1402, %v1553
          %v1595 = vmul.f32 %v1403, %v1558
          %v1596 = vmul.f32 %v1404, %v1563
          %v1597 = vpack.c.bf16 %v1566, %v1565
          %v1598 = vpack.c.bf16 %v1568, %v1567
          %v1599 = vpack.c.bf16 %v1570, %v1569
          %v1600 = vpack.c.bf16 %v1572, %v1571
          %v1601 = vpack.c.bf16 %v1574, %v1573
          %v1602 = vpack.c.bf16 %v1576, %v1575
          %v1603 = vpack.c.bf16 %v1578, %v1577
          %v1604 = vpack.c.bf16 %v1580, %v1579
          %v1605 = vpack.c.bf16 %v1582, %v1581
          %v1606 = vpack.c.bf16 %v1584, %v1583
          %v1607 = vpack.c.bf16 %v1586, %v1585
          %v1608 = vpack.c.bf16 %v1588, %v1587
          %v1609 = vpack.c.bf16 %v1590, %v1589
          %v1610 = vpack.c.bf16 %v1592, %v1591
          %v1611 = vpack.c.bf16 %v1594, %v1593
          %v1612 = vpack.c.bf16 %v1596, %v1595
          %v1613 = vld [vmem:[%s319] sm:$0xf]
          %v1614 = vld [vmem:[%s319 + $0x4] sm:$0xf]
          %v1615 = vld [vmem:[%s319 + $0x8] sm:$0xf]
          %v1616 = vld [vmem:[%s319 + $0xc] sm:$0xf]
          %v1617 = vld [vmem:[%s319 + $0x10] sm:$0xf]
          %v1618 = vld [vmem:[%s319 + $0x14] sm:$0xf]
          %v1619 = vld [vmem:[%s319 + $0x18] sm:$0xf]
          %v1620 = vld [vmem:[%s319 + $0x1c] sm:$0xf]
          %v1621 = vld [vmem:[%s319 + $0x20] sm:$0xf]
          %v1622 = vld [vmem:[%s319 + $0x24] sm:$0xf]
          %v1623 = vld [vmem:[%s319 + $0x28] sm:$0xf]
          %v1624 = vld [vmem:[%s319 + $0x2c] sm:$0xf]
          %v1625 = vld [vmem:[%s319 + $0x30] sm:$0xf]
          %v1626 = vld [vmem:[%s319 + $0x34] sm:$0xf]
          %v1627 = vld [vmem:[%s319 + $0x38] sm:$0xf]
          %v1628 = vld [vmem:[%s319 + $0x3c] sm:$0xf]
          %v1629 = vld [vmem:[%s319 + $0x40] sm:$0xf]
          %v1630 = vld [vmem:[%s319 + $0x44] sm:$0xf]
          %v1631 = vld [vmem:[%s319 + $0x48] sm:$0xf]
          %v1632 = vld [vmem:[%s319 + $0x4c] sm:$0xf]
          %v1633 = vld [vmem:[%s319 + $0x50] sm:$0xf]
          %v1634 = vld [vmem:[%s319 + $0x54] sm:$0xf]
          %v1635 = vld [vmem:[%s319 + $0x58] sm:$0xf]
          %v1636 = vld [vmem:[%s319 + $0x5c] sm:$0xf]
          %v1637 = vld [vmem:[%s319 + $0x60] sm:$0xf]
          %v1638 = vld [vmem:[%s319 + $0x64] sm:$0xf]
          %v1639 = vld [vmem:[%s319 + $0x68] sm:$0xf]
          %v1640 = vld [vmem:[%s319 + $0x6c] sm:$0xf]
          %v1641 = vld [vmem:[%s319 + $0x70] sm:$0xf]
          %v1642 = vld [vmem:[%s319 + $0x74] sm:$0xf]
          %v1643 = vld [vmem:[%s319 + $0x78] sm:$0xf]
          %v1644 = vld [vmem:[%s319 + $0x7c] sm:$0xf]
          %v1677 = vunpack.c.l.b16 %v1613
          %v1678 = vunpack.c.l.b16 %v1614
          %v1679 = vunpack.c.l.b16 %v1615
          %v1680 = vunpack.c.l.b16 %v1616
          %v1681 = vunpack.c.l.b16 %v1617
          %v1682 = vunpack.c.l.b16 %v1618
          %v1683 = vunpack.c.l.b16 %v1619
          %v1684 = vunpack.c.l.b16 %v1620
          %v1685 = vunpack.c.l.b16 %v1621
          %v1686 = vunpack.c.l.b16 %v1622
          %v1687 = vunpack.c.l.b16 %v1623
          %v1688 = vunpack.c.l.b16 %v1624
          %v1689 = vunpack.c.l.b16 %v1625
          %v1690 = vunpack.c.l.b16 %v1626
          %v1691 = vunpack.c.l.b16 %v1627
          %v1692 = vunpack.c.l.b16 %v1628
          %v1693 = vunpack.c.l.b16 %v1629
          %v1694 = vunpack.c.l.b16 %v1630
          %v1695 = vunpack.c.l.b16 %v1631
          %v1696 = vunpack.c.l.b16 %v1632
          %v1697 = vunpack.c.l.b16 %v1633
          %v1698 = vunpack.c.l.b16 %v1634
          %v1699 = vunpack.c.l.b16 %v1635
          %v1700 = vunpack.c.l.b16 %v1636
          %v1701 = vunpack.c.l.b16 %v1637
          %v1702 = vunpack.c.l.b16 %v1638
          %v1703 = vunpack.c.l.b16 %v1639
          %v1704 = vunpack.c.l.b16 %v1640
          %v1705 = vunpack.c.l.b16 %v1641
          %v1706 = vunpack.c.l.b16 %v1642
          %v1707 = vunpack.c.l.b16 %v1643
          %v1708 = vunpack.c.l.b16 %v1644
          %v1709 = vpack.c.b16 %v1678, %v1677
          %v1710 = vpack.c.b16 %v1680, %v1679
          %v1711 = vpack.c.b16 %v1682, %v1681
          %v1712 = vpack.c.b16 %v1684, %v1683
          %v1713 = vpack.c.b16 %v1686, %v1685
          %v1714 = vpack.c.b16 %v1688, %v1687
          %v1715 = vpack.c.b16 %v1690, %v1689
          %v1716 = vpack.c.b16 %v1692, %v1691
          %v1717 = vpack.c.b16 %v1694, %v1693
          %v1718 = vpack.c.b16 %v1696, %v1695
          %v1719 = vpack.c.b16 %v1698, %v1697
          %v1720 = vpack.c.b16 %v1700, %v1699
          %v1721 = vpack.c.b16 %v1702, %v1701
          %v1722 = vpack.c.b16 %v1704, %v1703
          %v1723 = vpack.c.b16 %v1706, %v1705
          %v1724 = vpack.c.b16 %v1708, %v1707
          %v1741 = vld [vmem:[#allocation10] sm:$0xf]
          %v1742 = vld [vmem:[#allocation10 + $0x4] sm:$0xf]
          %v1743 = vld [vmem:[#allocation10 + $0x8] sm:$0xf]
          %v1744 = vld [vmem:[#allocation10 + $0xc] sm:$0xf]
          %v1745 = vld [vmem:[#allocation10 + $0x10] sm:$0xf]
          %v1746 = vld [vmem:[#allocation10 + $0x14] sm:$0xf]
          %v1747 = vld [vmem:[#allocation10 + $0x18] sm:$0xf]
          %v1748 = vld [vmem:[#allocation10 + $0x1c] sm:$0xf]
          %v1749 = vld [vmem:[#allocation10 + $0x20] sm:$0xf]
          %v1750 = vld [vmem:[#allocation10 + $0x24] sm:$0xf]
          %v1751 = vld [vmem:[#allocation10 + $0x28] sm:$0xf]
          %v1752 = vld [vmem:[#allocation10 + $0x2c] sm:$0xf]
          %v1753 = vld [vmem:[#allocation10 + $0x30] sm:$0xf]
          %v1754 = vld [vmem:[#allocation10 + $0x34] sm:$0xf]
          %v1755 = vld [vmem:[#allocation10 + $0x38] sm:$0xf]
          %v1756 = vld [vmem:[#allocation10 + $0x3c] sm:$0xf]
          %v1757 = vld [vmem:[#allocation10 + $0x40] sm:$0xf]
          %v1758 = vld [vmem:[#allocation10 + $0x44] sm:$0xf]
          %v1759 = vld [vmem:[#allocation10 + $0x48] sm:$0xf]
          %v1760 = vld [vmem:[#allocation10 + $0x4c] sm:$0xf]
          %v1761 = vld [vmem:[#allocation10 + $0x50] sm:$0xf]
          %v1762 = vld [vmem:[#allocation10 + $0x54] sm:$0xf]
          %v1763 = vld [vmem:[#allocation10 + $0x58] sm:$0xf]
          %v1764 = vld [vmem:[#allocation10 + $0x5c] sm:$0xf]
          %v1765 = vld [vmem:[#allocation10 + $0x60] sm:$0xf]
          %v1766 = vld [vmem:[#allocation10 + $0x64] sm:$0xf]
          %v1767 = vld [vmem:[#allocation10 + $0x68] sm:$0xf]
          %v1768 = vld [vmem:[#allocation10 + $0x6c] sm:$0xf]
          %v1769 = vld [vmem:[#allocation10 + $0x70] sm:$0xf]
          %v1770 = vld [vmem:[#allocation10 + $0x74] sm:$0xf]
          %v1771 = vld [vmem:[#allocation10 + $0x78] sm:$0xf]
          %v1772 = vld [vmem:[#allocation10 + $0x7c] sm:$0xf]
          %v1773 = vld [vmem:[#allocation12] sm:$0x1]
          %v1775 = vlaneseq
          %v1776 = vshrl.u32 %v1775, 7
          %v1777 = vsub.s32 0, %v1776
          %v1778 = vrot.slane %v1773, %v1777
          %v1812 = vunpack.c.l.b16 %v1741
          %v1813 = vunpack.c.l.b16 %v1742
          %v1814 = vunpack.c.l.b16 %v1743
          %v1815 = vunpack.c.l.b16 %v1744
          %v1816 = vunpack.c.l.b16 %v1745
          %v1817 = vunpack.c.l.b16 %v1746
          %v1818 = vunpack.c.l.b16 %v1747
          %v1819 = vunpack.c.l.b16 %v1748
          %v1820 = vunpack.c.l.b16 %v1749
          %v1821 = vunpack.c.l.b16 %v1750
          %v1822 = vunpack.c.l.b16 %v1751
          %v1823 = vunpack.c.l.b16 %v1752
          %v1824 = vunpack.c.l.b16 %v1753
          %v1825 = vunpack.c.l.b16 %v1754
          %v1826 = vunpack.c.l.b16 %v1755
          %v1827 = vunpack.c.l.b16 %v1756
          %v1828 = vunpack.c.l.b16 %v1757
          %v1829 = vunpack.c.l.b16 %v1758
          %v1830 = vunpack.c.l.b16 %v1759
          %v1831 = vunpack.c.l.b16 %v1760
          %v1832 = vunpack.c.l.b16 %v1761
          %v1833 = vunpack.c.l.b16 %v1762
          %v1834 = vunpack.c.l.b16 %v1763
          %v1835 = vunpack.c.l.b16 %v1764
          %v1836 = vunpack.c.l.b16 %v1765
          %v1837 = vunpack.c.l.b16 %v1766
          %v1838 = vunpack.c.l.b16 %v1767
          %v1839 = vunpack.c.l.b16 %v1768
          %v1840 = vunpack.c.l.b16 %v1769
          %v1841 = vunpack.c.l.b16 %v1770
          %v1842 = vunpack.c.l.b16 %v1771
          %v1843 = vunpack.c.l.b16 %v1772
          %v1844 = vpack.c.b16 %v1813, %v1812
          %v1845 = vpack.c.b16 %v1815, %v1814
          %v1846 = vpack.c.b16 %v1817, %v1816
          %v1847 = vpack.c.b16 %v1819, %v1818
          %v1848 = vpack.c.b16 %v1821, %v1820
          %v1849 = vpack.c.b16 %v1823, %v1822
          %v1850 = vpack.c.b16 %v1825, %v1824
          %v1851 = vpack.c.b16 %v1827, %v1826
          %v1852 = vpack.c.b16 %v1829, %v1828
          %v1853 = vpack.c.b16 %v1831, %v1830
          %v1854 = vpack.c.b16 %v1833, %v1832
          %v1855 = vpack.c.b16 %v1835, %v1834
          %v1856 = vpack.c.b16 %v1837, %v1836
          %v1857 = vpack.c.b16 %v1839, %v1838
          %v1858 = vpack.c.b16 %v1841, %v1840
          %v1859 = vpack.c.b16 %v1843, %v1842
          %1876 = vmatprep.subr.bf16.mxu0 0
          %1877 = vmatpush1.bf16.msra.mxu0 %v1844
          %1878 = vmatprep.subr.bf16.mxu0 0
          %1879 = vmatpush1.bf16.msra.mxu0 %v1845
          %1880 = vmatprep.subr.bf16.mxu0 0
          %1881 = vmatpush1.bf16.msra.mxu0 %v1846
          %1882 = vmatprep.subr.bf16.mxu0 0
          %1883 = vmatpush1.bf16.msra.mxu0 %v1847
          %1884 = vmatprep.subr.bf16.mxu0 0
          %1885 = vmatpush1.bf16.msra.mxu0 %v1848
          %1886 = vmatprep.subr.bf16.mxu0 0
          %1887 = vmatpush1.bf16.msra.mxu0 %v1849
          %1888 = vmatprep.subr.bf16.mxu0 0
          %1889 = vmatpush1.bf16.msra.mxu0 %v1850
          %1890 = vmatprep.subr.bf16.mxu0 0
          %1891 = vmatpush1.bf16.msra.mxu0 %v1851
          %1892 = vmatprep.subr.bf16.mxu0 0
          %1893 = vmatpush1.bf16.msra.mxu0 %v1852
          %1894 = vmatprep.subr.bf16.mxu0 0
          %1895 = vmatpush1.bf16.msra.mxu0 %v1853
          %1896 = vmatprep.subr.bf16.mxu0 0
          %1897 = vmatpush1.bf16.msra.mxu0 %v1854
          %1898 = vmatprep.subr.bf16.mxu0 0
          %1899 = vmatpush1.bf16.msra.mxu0 %v1855
          %1900 = vmatprep.subr.bf16.mxu0 0
          %1901 = vmatpush1.bf16.msra.mxu0 %v1856
          %1902 = vmatprep.subr.bf16.mxu0 0
          %1903 = vmatpush1.bf16.msra.mxu0 %v1857
          %1904 = vmatprep.subr.bf16.mxu0 0
          %1905 = vmatpush1.bf16.msra.mxu0 %v1858
          %1906 = vmatprep.subr.bf16.mxu0 0
          %1907 = vmatpush1.bf16.msra.mxu0 %v1859
          %1908 = vmatprep.mubr.bf16.mxu0 %v1709
          %1909 = vmatmul.mubr.bf16.gmra.mrb[0].mxu0 %v1597
          %v1910 = vpop.f32.mrb[0].mxu0
          %v1911 = vadd.f32 %v1778, %v1910
          %v1912 = vpop.f32.mrb[0].mxu0
          %v1913 = vpop.f32.mrb[0].mxu0
          %v1914 = vadd.f32 %v1778, %v1913
          %v1915 = vpop.f32.mrb[0].mxu0
          %1916 = vmatprep.mubr.bf16.mxu0 %v1710
          %1917 = vmatmul.mubr.bf16.gmra.mrb[0].mxu0 %v1598
          %v1918 = vpop.f32.mrb[0].mxu0
          %v1919 = vadd.f32 %v1778, %v1918
          %v1920 = vpop.f32.mrb[0].mxu0
          %v1921 = vpop.f32.mrb[0].mxu0
          %v1922 = vadd.f32 %v1778, %v1921
          %v1923 = vpop.f32.mrb[0].mxu0
          %1924 = vmatprep.mubr.bf16.mxu0 %v1711
          %1925 = vmatmul.mubr.bf16.gmra.mrb[0].mxu0 %v1599
          %v1926 = vpop.f32.mrb[0].mxu0
          %v1927 = vadd.f32 %v1778, %v1926
          %v1928 = vpop.f32.mrb[0].mxu0
          %v1929 = vpop.f32.mrb[0].mxu0
          %v1930 = vadd.f32 %v1778, %v1929
          %v1931 = vpop.f32.mrb[0].mxu0
          %1932 = vmatprep.mubr.bf16.mxu0 %v1712
          %1933 = vmatmul.mubr.bf16.gmra.mrb[0].mxu0 %v1600
          %v1934 = vpop.f32.mrb[0].mxu0
          %v1935 = vadd.f32 %v1778, %v1934
          %v1936 = vpop.f32.mrb[0].mxu0
          %v1937 = vpop.f32.mrb[0].mxu0
          %v1938 = vadd.f32 %v1778, %v1937
          %v1939 = vpop.f32.mrb[0].mxu0
          %1940 = vmatprep.mubr.bf16.mxu0 %v1713
          %1941 = vmatmul.mubr.bf16.gmra.mrb[0].mxu0 %v1601
          %v1942 = vpop.f32.mrb[0].mxu0
          %v1943 = vadd.f32 %v1778, %v1942
          %v1944 = vpop.f32.mrb[0].mxu0
          %v1945 = vpop.f32.mrb[0].mxu0
          %v1946 = vadd.f32 %v1778, %v1945
          %v1947 = vpop.f32.mrb[0].mxu0
          %1948 = vmatprep.mubr.bf16.mxu0 %v1714
          %1949 = vmatmul.mubr.bf16.gmra.mrb[0].mxu0 %v1602
          %v1950 = vpop.f32.mrb[0].mxu0
          %v1951 = vadd.f32 %v1778, %v1950
          %v1952 = vpop.f32.mrb[0].mxu0
          %v1953 = vpop.f32.mrb[0].mxu0
          %v1954 = vadd.f32 %v1778, %v1953
          %v1955 = vpop.f32.mrb[0].mxu0
          %1956 = vmatprep.mubr.bf16.mxu0 %v1715
          %1957 = vmatmul.mubr.bf16.gmra.mrb[0].mxu0 %v1603
          %v1958 = vpop.f32.mrb[0].mxu0
          %v1959 = vadd.f32 %v1778, %v1958
          %v1960 = vpop.f32.mrb[0].mxu0
          %v1961 = vpop.f32.mrb[0].mxu0
          %v1962 = vadd.f32 %v1778, %v1961
          %v1963 = vpop.f32.mrb[0].mxu0
          %1964 = vmatprep.mubr.bf16.mxu0 %v1716
          %1965 = vmatmul.mubr.bf16.gmra.mrb[0].mxu0 %v1604
          %v1966 = vpop.f32.mrb[0].mxu0
          %v1967 = vadd.f32 %v1778, %v1966
          %v1968 = vpop.f32.mrb[0].mxu0
          %v1969 = vpop.f32.mrb[0].mxu0
          %v1970 = vadd.f32 %v1778, %v1969
          %v1971 = vpop.f32.mrb[0].mxu0
          %1972 = vmatprep.mubr.bf16.mxu0 %v1717
          %1973 = vmatmul.mubr.bf16.gmra.mrb[0].mxu0 %v1605
          %v1974 = vpop.f32.mrb[0].mxu0
          %v1975 = vadd.f32 %v1778, %v1974
          %v1976 = vpop.f32.mrb[0].mxu0
          %v1977 = vpop.f32.mrb[0].mxu0
          %v1978 = vadd.f32 %v1778, %v1977
          %v1979 = vpop.f32.mrb[0].mxu0
          %1980 = vmatprep.mubr.bf16.mxu0 %v1718
          %1981 = vmatmul.mubr.bf16.gmra.mrb[0].mxu0 %v1606
          %v1982 = vpop.f32.mrb[0].mxu0
          %v1983 = vadd.f32 %v1778, %v1982
          %v1984 = vpop.f32.mrb[0].mxu0
          %v1985 = vpop.f32.mrb[0].mxu0
          %v1986 = vadd.f32 %v1778, %v1985
          %v1987 = vpop.f32.mrb[0].mxu0
          %1988 = vmatprep.mubr.bf16.mxu0 %v1719
          %1989 = vmatmul.mubr.bf16.gmra.mrb[0].mxu0 %v1607
          %v1990 = vpop.f32.mrb[0].mxu0
          %v1991 = vadd.f32 %v1778, %v1990
          %v1992 = vpop.f32.mrb[0].mxu0
          %v1993 = vpop.f32.mrb[0].mxu0
          %v1994 = vadd.f32 %v1778, %v1993
          %v1995 = vpop.f32.mrb[0].mxu0
          %1996 = vmatprep.mubr.bf16.mxu0 %v1720
          %1997 = vmatmul.mubr.bf16.gmra.mrb[0].mxu0 %v1608
          %v1998 = vpop.f32.mrb[0].mxu0
          %v1999 = vadd.f32 %v1778, %v1998
          %v2000 = vpop.f32.mrb[0].mxu0
          %v2001 = vpop.f32.mrb[0].mxu0
          %v2002 = vadd.f32 %v1778, %v2001
          %v2003 = vpop.f32.mrb[0].mxu0
          %2004 = vmatprep.mubr.bf16.mxu0 %v1721
          %2005 = vmatmul.mubr.bf16.gmra.mrb[0].mxu0 %v1609
          %v2006 = vpop.f32.mrb[0].mxu0
          %v2007 = vadd.f32 %v1778, %v2006
          %v2008 = vpop.f32.mrb[0].mxu0
          %v2009 = vpop.f32.mrb[0].mxu0
          %v2010 = vadd.f32 %v1778, %v2009
          %v2011 = vpop.f32.mrb[0].mxu0
          %2012 = vmatprep.mubr.bf16.mxu0 %v1722
          %2013 = vmatmul.mubr.bf16.gmra.mrb[0].mxu0 %v1610
          %v2014 = vpop.f32.mrb[0].mxu0
          %v2015 = vadd.f32 %v1778, %v2014
          %v2016 = vpop.f32.mrb[0].mxu0
          %v2017 = vpop.f32.mrb[0].mxu0
          %v2018 = vadd.f32 %v1778, %v2017
          %v2019 = vpop.f32.mrb[0].mxu0
          %2020 = vmatprep.mubr.bf16.mxu0 %v1723
          %2021 = vmatmul.mubr.bf16.gmra.mrb[0].mxu0 %v1611
          %v2022 = vpop.f32.mrb[0].mxu0
          %v2023 = vadd.f32 %v1778, %v2022
          %v2024 = vpop.f32.mrb[0].mxu0
          %v2025 = vpop.f32.mrb[0].mxu0
          %v2026 = vadd.f32 %v1778, %v2025
          %v2027 = vpop.f32.mrb[0].mxu0
          %2028 = vmatprep.mubr.bf16.mxu0 %v1724
          %2029 = vmatmul.mubr.bf16.gmra.mrb[0].mxu0 %v1612
          %v2030 = vpop.f32.mrb[0].mxu0
          %v2031 = vadd.f32 %v1778, %v2030
          %v2032 = vpop.f32.mrb[0].mxu0
          %v2033 = vpop.f32.mrb[0].mxu0
          %v2034 = vadd.f32 %v1778, %v2033
          %v2035 = vpop.f32.mrb[0].mxu0
          %2036 = vdwg.mxu0
          %v2037 = vmax.f32 %v1911, 0.0
          %v2038 = vmax.f32 %v1914, 0.0
          %v2039 = vmax.f32 %v1919, 0.0
          %v2040 = vmax.f32 %v1922, 0.0
          %v2041 = vmax.f32 %v1927, 0.0
          %v2042 = vmax.f32 %v1930, 0.0
          %v2043 = vmax.f32 %v1935, 0.0
          %v2044 = vmax.f32 %v1938, 0.0
          %v2045 = vmax.f32 %v1943, 0.0
          %v2046 = vmax.f32 %v1946, 0.0
          %v2047 = vmax.f32 %v1951, 0.0
          %v2048 = vmax.f32 %v1954, 0.0
          %v2049 = vmax.f32 %v1959, 0.0
          %v2050 = vmax.f32 %v1962, 0.0
          %v2051 = vmax.f32 %v1967, 0.0
          %v2052 = vmax.f32 %v1970, 0.0
          %v2053 = vmax.f32 %v1975, 0.0
          %v2054 = vmax.f32 %v1978, 0.0
          %v2055 = vmax.f32 %v1983, 0.0
          %v2056 = vmax.f32 %v1986, 0.0
          %v2057 = vmax.f32 %v1991, 0.0
          %v2058 = vmax.f32 %v1994, 0.0
          %v2059 = vmax.f32 %v1999, 0.0
          %v2060 = vmax.f32 %v2002, 0.0
          %v2061 = vmax.f32 %v2007, 0.0
          %v2062 = vmax.f32 %v2010, 0.0
          %v2063 = vmax.f32 %v2015, 0.0
          %v2064 = vmax.f32 %v2018, 0.0
          %v2065 = vmax.f32 %v2023, 0.0
          %v2066 = vmax.f32 %v2026, 0.0
          %v2067 = vmax.f32 %v2031, 0.0
          %v2068 = vmax.f32 %v2034, 0.0
          %v2069 = vpack.c.bf16 %v2038, %v2037
          %v2070 = vpack.c.bf16 %v2040, %v2039
          %v2071 = vpack.c.bf16 %v2042, %v2041
          %v2072 = vpack.c.bf16 %v2044, %v2043
          %v2073 = vpack.c.bf16 %v2046, %v2045
          %v2074 = vpack.c.bf16 %v2048, %v2047
          %v2075 = vpack.c.bf16 %v2050, %v2049
          %v2076 = vpack.c.bf16 %v2052, %v2051
          %v2077 = vpack.c.bf16 %v2054, %v2053
          %v2078 = vpack.c.bf16 %v2056, %v2055
          %v2079 = vpack.c.bf16 %v2058, %v2057
          %v2080 = vpack.c.bf16 %v2060, %v2059
          %v2081 = vpack.c.bf16 %v2062, %v2061
          %v2082 = vpack.c.bf16 %v2064, %v2063
          %v2083 = vpack.c.bf16 %v2066, %v2065
          %v2084 = vpack.c.bf16 %v2068, %v2067
          %v2101 = vunpack.c.l.b16 %v2069
          %v2102 = vunpack.c.h.b16 %v2069
          %v2103 = vunpack.c.l.b16 %v2070
          %v2104 = vunpack.c.h.b16 %v2070
          %v2105 = vunpack.c.l.b16 %v2071
          %v2106 = vunpack.c.h.b16 %v2071
          %v2107 = vunpack.c.l.b16 %v2072
          %v2108 = vunpack.c.h.b16 %v2072
          %v2109 = vunpack.c.l.b16 %v2073
          %v2110 = vunpack.c.h.b16 %v2073
          %v2111 = vunpack.c.l.b16 %v2074
          %v2112 = vunpack.c.h.b16 %v2074
          %v2113 = vunpack.c.l.b16 %v2075
          %v2114 = vunpack.c.h.b16 %v2075
          %v2115 = vunpack.c.l.b16 %v2076
          %v2116 = vunpack.c.h.b16 %v2076
          %v2117 = vunpack.c.l.b16 %v2077
          %v2118 = vunpack.c.h.b16 %v2077
          %v2119 = vunpack.c.l.b16 %v2078
          %v2120 = vunpack.c.h.b16 %v2078
          %v2121 = vunpack.c.l.b16 %v2079
          %v2122 = vunpack.c.h.b16 %v2079
          %v2123 = vunpack.c.l.b16 %v2080
          %v2124 = vunpack.c.h.b16 %v2080
          %v2125 = vunpack.c.l.b16 %v2081
          %v2126 = vunpack.c.h.b16 %v2081
          %v2127 = vunpack.c.l.b16 %v2082
          %v2128 = vunpack.c.h.b16 %v2082
          %v2129 = vunpack.c.l.b16 %v2083
          %v2130 = vunpack.c.h.b16 %v2083
          %v2131 = vunpack.c.l.b16 %v2084
          %v2132 = vunpack.c.h.b16 %v2084
          %v2133 = vpack.c.b16 %v2101, %v2101
          %v2134 = vpack.c.b16 %v2102, %v2102
          %v2135 = vpack.c.b16 %v2103, %v2103
          %v2136 = vpack.c.b16 %v2104, %v2104
          %v2137 = vpack.c.b16 %v2105, %v2105
          %v2138 = vpack.c.b16 %v2106, %v2106
          %v2139 = vpack.c.b16 %v2107, %v2107
          %v2140 = vpack.c.b16 %v2108, %v2108
          %v2141 = vpack.c.b16 %v2109, %v2109
          %v2142 = vpack.c.b16 %v2110, %v2110
          %v2143 = vpack.c.b16 %v2111, %v2111
          %v2144 = vpack.c.b16 %v2112, %v2112
          %v2145 = vpack.c.b16 %v2113, %v2113
          %v2146 = vpack.c.b16 %v2114, %v2114
          %v2147 = vpack.c.b16 %v2115, %v2115
          %v2148 = vpack.c.b16 %v2116, %v2116
          %v2149 = vpack.c.b16 %v2117, %v2117
          %v2150 = vpack.c.b16 %v2118, %v2118
          %v2151 = vpack.c.b16 %v2119, %v2119
          %v2152 = vpack.c.b16 %v2120, %v2120
          %v2153 = vpack.c.b16 %v2121, %v2121
          %v2154 = vpack.c.b16 %v2122, %v2122
          %v2155 = vpack.c.b16 %v2123, %v2123
          %v2156 = vpack.c.b16 %v2124, %v2124
          %v2157 = vpack.c.b16 %v2125, %v2125
          %v2158 = vpack.c.b16 %v2126, %v2126
          %v2159 = vpack.c.b16 %v2127, %v2127
          %v2160 = vpack.c.b16 %v2128, %v2128
          %v2161 = vpack.c.b16 %v2129, %v2129
          %v2162 = vpack.c.b16 %v2130, %v2130
          %v2163 = vpack.c.b16 %v2131, %v2131
          %v2164 = vpack.c.b16 %v2132, %v2132
          %2197 = vst [vmem:[%s363] sm:$0xf] %v2133
          %2198 = vst [vmem:[%s363 + $0x4] sm:$0xf] %v2134
          %2199 = vst [vmem:[%s363 + $0x8] sm:$0xf] %v2135
          %2200 = vst [vmem:[%s363 + $0xc] sm:$0xf] %v2136
          %2201 = vst [vmem:[%s363 + $0x10] sm:$0xf] %v2137
          %2202 = vst [vmem:[%s363 + $0x14] sm:$0xf] %v2138
          %2203 = vst [vmem:[%s363 + $0x18] sm:$0xf] %v2139
          %2204 = vst [vmem:[%s363 + $0x1c] sm:$0xf] %v2140
          %2205 = vst [vmem:[%s363 + $0x20] sm:$0xf] %v2141
          %2206 = vst [vmem:[%s363 + $0x24] sm:$0xf] %v2142
          %2207 = vst [vmem:[%s363 + $0x28] sm:$0xf] %v2143
          %2208 = vst [vmem:[%s363 + $0x2c] sm:$0xf] %v2144
          %2209 = vst [vmem:[%s363 + $0x30] sm:$0xf] %v2145
          %2210 = vst [vmem:[%s363 + $0x34] sm:$0xf] %v2146
          %2211 = vst [vmem:[%s363 + $0x38] sm:$0xf] %v2147
          %2212 = vst [vmem:[%s363 + $0x3c] sm:$0xf] %v2148
          %2213 = vst [vmem:[%s363 + $0x40] sm:$0xf] %v2149
          %2214 = vst [vmem:[%s363 + $0x44] sm:$0xf] %v2150
          %2215 = vst [vmem:[%s363 + $0x48] sm:$0xf] %v2151
          %2216 = vst [vmem:[%s363 + $0x4c] sm:$0xf] %v2152
          %2217 = vst [vmem:[%s363 + $0x50] sm:$0xf] %v2153
          %2218 = vst [vmem:[%s363 + $0x54] sm:$0xf] %v2154
          %2219 = vst [vmem:[%s363 + $0x58] sm:$0xf] %v2155
          %2220 = vst [vmem:[%s363 + $0x5c] sm:$0xf] %v2156
          %2221 = vst [vmem:[%s363 + $0x60] sm:$0xf] %v2157
          %2222 = vst [vmem:[%s363 + $0x64] sm:$0xf] %v2158
          %2223 = vst [vmem:[%s363 + $0x68] sm:$0xf] %v2159
          %2224 = vst [vmem:[%s363 + $0x6c] sm:$0xf] %v2160
          %2225 = vst [vmem:[%s363 + $0x70] sm:$0xf] %v2161
          %2226 = vst [vmem:[%s363 + $0x74] sm:$0xf] %v2162
          %2227 = vst [vmem:[%s363 + $0x78] sm:$0xf] %v2163
          %2228 = vst [vmem:[%s363 + $0x7c] sm:$0xf] %v2164
        $region68: #{tpu_custom_call.1} parent=39 // pred_fallthru
          _
        %s2229 = sand.u32 %s168, 1
        %s2230 = scalar_lea.sflag [#allocation6], %s2229
        %s2231 = sand.u32 %s168, 1
        %s2232 = smul.addr %s2231, 128
        %s2233 = scalar_lea.vmem [#allocation13], %s2232
        // Predicated region
        $region69: #{tpu_custom_call.1} parent=39 // pred_check
          %p2234 = pneg %p178
        $region70: #{tpu_custom_call.1} parent=39 // pred_check_branch
          %2236 = sbr.rel (%p2234) target = $region72
        $region71: #{tpu_custom_call.1} parent=39 // pred_region
          %s2237 = smul.u32 32, %s30
          %s2239 = ssub.s32 2048, 2048
          %2240 = vsyncadd %s2230, %s2239
          %s2241 = smul.addr %s2237, 64
          %s2242 = scalar_lea.hbm %s5, %s2241
          %s2243 = sshll.u32 %s2233, 4
          %s2244 = int_to_ptr.vmem [resolvable:$true] %s2243
          %2249 = dma.vmem_to_hbm [thread:$0]  %s2244, 2048, %s2242, %s2230, 64, 64, 4
        $region72: #{tpu_custom_call.1} parent=39 // pred_fallthru
          _
      $region40: #{tpu_custom_call.1} parent=5 // pred_fallthru
        _
      %p2250 = scmp.le.s32.totalorder 2, %s21
      // Predicated region
      $region73: #{tpu_custom_call.1} parent=5 // pred_check
        %p2251 = pneg %p2250
      $region74: #{tpu_custom_call.1} parent=5 // pred_check_branch
        %2253 = sbr.rel (%p2251) target = $region76
      $region75: #{tpu_custom_call.1} parent=5 // pred_region
        %s2254 = ssub.s32 %s21, 2
        // Predicated region
        $region77: #{tpu_custom_call.1} parent=75 // pred_check
          %p2255 = pneg %p184
        $region78: #{tpu_custom_call.1} parent=75 // pred_check_branch
          %2257 = sbr.rel (%p2255) target = $region80
        $region79: #{tpu_custom_call.1} parent=75 // pred_region
          %s2258 = sand.u32 %s169, 1
          %s2259 = scalar_lea.sflag [#allocation6], %s2258
          %s2260 = sand.u32 %s169, 1
          %s2261 = smul.addr %s2260, 128
          %s2262 = scalar_lea.vmem [#allocation13], %s2261
          %2263 = dma.done %s2259, 2048
        $region80: #{tpu_custom_call.1} parent=75 // pred_fallthru
          _
      $region76: #{tpu_custom_call.1} parent=5 // pred_fallthru
        _
    $region6: #{tpu_custom_call.1} parent=1 // loop_footer
      %s25 = sadd.s32 1, %s21
    $region7: #{tpu_custom_call.1} parent=1 // loop_footer_branch
      %20 = sbr.rel target = $region3
    $region8: #{tpu_custom_call.1} parent=1 // loop_exit
      _
    %2264 = vsyncpa [#allocation5], 1
    %s2265 = scalar_lea.sflag [#allocation5], 1
    %2266 = vsyncpa %s2265, 1
    %2267 = vsyncpa [#allocation8], 1
    %s2268 = scalar_lea.sflag [#allocation8], 1
    %2269 = vsyncpa %s2268, 1
    %2270 = vsyncpa [#allocation11], 1
    %2271 = vsyncpa [#allocation6], 1
    %s2272 = scalar_lea.sflag [#allocation6], 1
    %2273 = vsyncpa %s2272, 1

</llo_original>
